<compile_context>
chip_gen: v5e
topology: v5e:2x2
jax: 0.10.0
libtpu: 0.0.40
codegen_flags: <defaults>
</compile_context>

<pallas_src>
import jax
import jax.numpy as jnp
import numpy as np
from jax.experimental import pallas as pl
from jax.experimental.pallas import tpu as pltpu

HID_DIM = 32
N_HEADS = 4
PF_DIM = 64
HEAD_DIM = HID_DIM // N_HEADS
LN_EPS = 1e-5

# ------------------------- parameter slab row layout ----------------------------
_ROW_SAW = 0                       # rows   0:32   self-attn  [Wq/s | Wk | Wv | Wo]  (H x 4H)
_ROW_EAW = HID_DIM                 # rows  32:64   enc-attn   [Wq/s | Wk | Wv | Wo]
_ROW_W1 = 2 * HID_DIM              # rows  64:96   W1 in lanes 0:PF_DIM (rest 0)
_ROW_W2 = 3 * HID_DIM              # rows  96:160  W2 in lanes 0:HID_DIM (rest 0)
_ROW_VEC = 3 * HID_DIM + PF_DIM    # rows 160:176  bias / LayerNorm vectors
SLAB_ROWS = _ROW_VEC + 16          # 176 (multiple of 8)


# ----------------------------------- kernel ------------------------------------

def decoder_layer_kernel(trg_ref, enc_ref, tmask_ref, smask_ref, w_ref, out_ref):
    T = trg_ref.shape[1]
    S = enc_ref.shape[1]
    H = HID_DIM

    trg = trg_ref[0]                       # [T, H]  (one batch element per grid step)
    enc = enc_ref[0]                       # [S, H]
    W = w_ref[...]                         # [SLAB_ROWS, 128]

    # static slices of the packed parameter slab
    sa_w = W[_ROW_SAW:_ROW_SAW + H, :]             # [H, 4H]
    ea_w = W[_ROW_EAW:_ROW_EAW + H, :]             # [H, 4H]
    w1f = W[_ROW_W1:_ROW_W1 + H, :]                # [H, 128] (lanes >= PF_DIM are zero)
    w2 = W[_ROW_W2:_ROW_W2 + PF_DIM, 0:H]          # [PF, H]

    v = _ROW_VEC
    sa_b = W[v + 0:v + 1, :]                       # [1, 4H]
    ea_b = W[v + 1:v + 2, :]                       # [1, 4H]
    b1f = W[v + 2:v + 3, :]                        # [1, 128] (lanes >= PF_DIM are zero)
    b2 = W[v + 3:v + 4, 0:H]                       # [1, H]
    ln_g = (W[v + 4:v + 5, 0:H], W[v + 6:v + 7, 0:H], W[v + 8:v + 9, 0:H])
    ln_b = (W[v + 5:v + 6, 0:H], W[v + 7:v + 8, 0:H], W[v + 9:v + 10, 0:H])

    # mask -> additive bias, computed once per attention (shared across heads)
    tbias = jnp.where(tmask_ref[0] == 0.0, jnp.float32(-1e10), jnp.float32(0.0))   # [T, T]
    sbias = jnp.where(smask_ref[0] == 0.0, jnp.float32(-1e10), jnp.float32(0.0))   # [1, S]

    def layer_norm(x, idx):
        mu = jnp.mean(x, axis=-1, keepdims=True)
        xc = x - mu
        var = jnp.mean(xc * xc, axis=-1, keepdims=True)
        return xc * jax.lax.rsqrt(var + LN_EPS) * ln_g[idx] + ln_b[idx]

    def split_heads(x, L):                  # [L, H] -> [NH, L, dh]
        return x.reshape(L, N_HEADS, HEAD_DIM).transpose(1, 0, 2)

    def mha(q_in, kv_in, Tq, Tk, bias, w, b, fused):
        """q_in: [Tq, H], kv_in: [Tk, H]; w: [H, 4H] = [Wq/s | Wk | Wv | Wo]."""
        if fused:                            # self-attention: one fused QKV matmul
            qkv = jnp.dot(q_in, w[:, :3 * H], preferred_element_type=jnp.float32) + b[:, :3 * H]
            Q, K, V = qkv[:, :H], qkv[:, H:2 * H], qkv[:, 2 * H:3 * H]
        else:                                # cross-attention: Q from q, fused KV from enc
            Q = jnp.dot(q_in, w[:, :H], preferred_element_type=jnp.float32) + b[:, :H]
            kv = jnp.dot(kv_in, w[:, H:3 * H], preferred_element_type=jnp.float32) + b[:, H:3 * H]
            K, V = kv[:, :H], kv[:, H:]

        Qh = split_heads(Q, Tq)              # [NH, Tq, dh]
        Kh = split_heads(K, Tk)              # [NH, Tk, dh]
        Vh = split_heads(V, Tk)              # [NH, Tk, dh]

        # batched over heads: 2 dot_generals instead of 8 per-head matmuls + concats
        energy = jnp.einsum('hqd,hkd->hqk', Qh, Kh,
                            preferred_element_type=jnp.float32) + bias[None, :, :]
        m = jnp.max(energy, axis=-1, keepdims=True)
        e = jnp.exp(energy - m)
        attn = e / jnp.sum(e, axis=-1, keepdims=True)      # exact softmax (no approx recip)
        ctx = jnp.einsum('hqk,hkd->hqd', attn, Vh,
                         preferred_element_type=jnp.float32)            # [NH, Tq, dh]

        ctx2d = ctx.transpose(1, 0, 2).reshape(Tq, H)                   # [Tq, H]
        out = jnp.dot(ctx2d, w[:, 3 * H:], preferred_element_type=jnp.float32) + b[:, 3 * H:]
        return out, attn                                                # attn: [NH, Tq, Tk]

    # --- self attention + residual + LayerNorm ---
    sa_out, _ = mha(trg, trg, T, T, tbias, sa_w, sa_b, fused=True)
    x1 = layer_norm(trg + sa_out, 0)

    # --- encoder attention + residual + LayerNorm (emits attention weights) ---
    ea_out, attn_h = mha(x1, enc, T, S, sbias, ea_w, ea_b, fused=False)
    x2 = layer_norm(x1 + ea_out, 1)

    # --- position-wise feedforward + residual + LayerNorm ---
    hdd = jnp.maximum(jnp.dot(x2, w1f, preferred_element_type=jnp.float32) + b1f, 0.0)  # [T,128]
    ff = jnp.dot(hdd[:, :PF_DIM], w2, preferred_element_type=jnp.float32) + b2
    y = layer_norm(x2 + ff, 2)                                                          # [T, H]

    # --- merged 128-lane output slab: [hidden | attention weights | zero pad] ---
    attn_flat = attn_h.transpose(1, 0, 2).reshape(T, N_HEADS * S)       # [T, NH*S]
    pad = jnp.zeros((T, 128 - H - N_HEADS * S), jnp.float32)
    out_ref[...] = jnp.concatenate([y, attn_flat, pad], axis=-1)        # one dense store


# ---------------------------------- wrappers -------------------------------------

def pack_decoder_params(params):
    """One-time packing of all DecoderLayer weights into a single lane-dense
    f32 [SLAB_ROWS, 128] slab.  Call ONCE at init, outside the per-step hot path."""
    scale = jnp.sqrt(jnp.float32(HEAD_DIM))

    def pack_w(w):   # [4, H, H] -> [H, 4H]; fold 1/sqrt(dh) into Wq
        return jnp.concatenate([w[0] / scale, w[1], w[2], w[3]], axis=1)

    def pack_b(b):   # [4, H] -> [4H]; fold 1/sqrt(dh) into bq
        return jnp.concatenate([b[0] / scale, b[1], b[2], b[3]], axis=0)

    slab = jnp.zeros((SLAB_ROWS, 128), jnp.float32)
    slab = slab.at[_ROW_SAW:_ROW_SAW + HID_DIM, :].set(pack_w(params["sa_w"]))
    slab = slab.at[_ROW_EAW:_ROW_EAW + HID_DIM, :].set(pack_w(params["ea_w"]))
    slab = slab.at[_ROW_W1:_ROW_W1 + HID_DIM, :PF_DIM].set(params["w1"])
    slab = slab.at[_ROW_W2:_ROW_W2 + PF_DIM, :HID_DIM].set(params["w2"])
    v = _ROW_VEC
    slab = slab.at[v + 0, :].set(pack_b(params["sa_b"]))
    slab = slab.at[v + 1, :].set(pack_b(params["ea_b"]))
    slab = slab.at[v + 2, :PF_DIM].set(params["b1"])
    slab = slab.at[v + 3, :HID_DIM].set(params["b2"])
    for i in range(3):
        slab = slab.at[v + 4 + 2 * i, :HID_DIM].set(params["ln_g"][i])
        slab = slab.at[v + 5 + 2 * i, :HID_DIM].set(params["ln_b"][i])
    return slab


@jax.jit
def decoder_layer(trg, enc_src, trg_mask, src_mask, wslab):
    B, T, H = trg.shape
    S = enc_src.shape[1]
    assert H == HID_DIM

    tmask = trg_mask[:, 0]                  # [B, T, T]
    smask = src_mask[:, 0]                  # [B, 1, S]

    slab_out = pl.pallas_call(
        decoder_layer_kernel,
        grid=(B,),                                           # one batch element / grid step
        in_specs=[
            pl.BlockSpec((1, T, H), lambda b: (b, 0, 0)),    # trg
            pl.BlockSpec((1, S, H), lambda b: (b, 0, 0)),    # enc_src
            pl.BlockSpec((1, T, T), lambda b: (b, 0, 0)),    # trg mask
            pl.BlockSpec((1, 1, S), lambda b: (b, 0, 0)),    # src mask
            pl.BlockSpec((SLAB_ROWS, 128), lambda b: (0, 0)),  # packed params (shared)
        ],
        out_specs=pl.BlockSpec((T, 128), lambda b: (b, 0)),
        out_shape=jax.ShapeDtypeStruct((B * T, 128), jnp.float32),
        compiler_params=pltpu.CompilerParams(
            dimension_semantics=("parallel",)),              # lets v7x use both TensorCores
    )(trg, enc_src, tmask, smask, wslab)

    out = slab_out[:, :H].reshape(B, T, H)
    attn = slab_out[:, H:H + N_HEADS * S].reshape(B, T, N_HEADS, S).transpose(0, 2, 1, 3)
    return out, attn


# ----------------------------- pure-JAX reference --------------------------------

def _ref_mha(q_in, kv_in, mask, w, b):
    Q = q_in @ w[0] + b[0]
    K = kv_in @ w[1] + b[1]
    V = kv_in @ w[2] + b[2]
    B_, Tq, _ = Q.shape
    Tk = K.shape[1]
    Qh = Q.reshape(B_, Tq, N_HEADS, HEAD_DIM).transpose(0, 2, 1, 3)
    Kh = K.reshape(B_, Tk, N_HEADS, HEAD_DIM).transpose(0, 2, 1, 3)
    Vh = V.reshape(B_, Tk, N_HEADS, HEAD_DIM).transpose(0, 2, 1, 3)
    energy = jnp.einsum('bhqd,bhkd->bhqk', Qh, Kh) / jnp.sqrt(jnp.float32(HEAD_DIM))
    energy = jnp.where(mask == 0, -1e10, energy)
    attn = jax.nn.softmax(energy, axis=-1)
    ctx = jnp.einsum('bhqk,bhkd->bhqd', attn, Vh)
    ctx = ctx.transpose(0, 2, 1, 3).reshape(B_, Tq, HID_DIM)
    return ctx @ w[3] + b[3], attn


def ref_decoder_layer(trg, enc_src, trg_mask, src_mask, p):
    def ln(x, g, b):
        mu = jnp.mean(x, -1, keepdims=True)
        var = jnp.mean((x - mu) ** 2, -1, keepdims=True)
        return (x - mu) * jax.lax.rsqrt(var + LN_EPS) * g + b
    sa, _ = _ref_mha(trg, trg, trg_mask, p["sa_w"], p["sa_b"])
    x1 = ln(trg + sa, p["ln_g"][0], p["ln_b"][0])
    ea, attn = _ref_mha(x1, enc_src, src_mask, p["ea_w"], p["ea_b"])
    x2 = ln(x1 + ea, p["ln_g"][1], p["ln_b"][1])
    h = jax.nn.relu(x2 @ p["w1"] + p["b1"])
    ff = h @ p["w2"] + p["b2"]
    return ln(x2 + ff, p["ln_g"][2], p["ln_b"][2]), attn


# ------------------------------------ main ---------------------------------------

if __name__ == "__main__":
    B, T, S = 2, 8, 12

    key = jax.random.PRNGKey(0)
    ks = jax.random.split(key, 12)

    def rnd(k, shape, s=0.2):
        return s * jax.random.normal(k, shape, dtype=jnp.float32)

    params = dict(
        sa_w=rnd(ks[0], (4, HID_DIM, HID_DIM)),
        sa_b=rnd(ks[1], (4, HID_DIM)),
        ea_w=rnd(ks[2], (4, HID_DIM, HID_DIM)),
        ea_b=rnd(ks[3], (4, HID_DIM)),
        w1=rnd(ks[4], (HID_DIM, PF_DIM)),
        b1=rnd(ks[5], (PF_DIM,)),
        w2=rnd(ks[6], (PF_DIM, HID_DIM)),
        b2=rnd(ks[7], (HID_DIM,)),
        ln_g=1.0 + rnd(ks[8], (3, HID_DIM), 0.05),
        ln_b=rnd(ks[9], (3, HID_DIM), 0.05),
    )

    trg = jax.random.normal(ks[10], (B, T, HID_DIM), dtype=jnp.float32)
    enc_src = jax.random.normal(ks[11], (B, S, HID_DIM), dtype=jnp.float32)

    # causal target mask + source padding mask (batch 1 has 3 padded positions)
    trg_mask = jnp.broadcast_to(jnp.tril(jnp.ones((T, T), jnp.float32)),
                                (B, 1, T, T))
    src_mask = jnp.ones((B, 1, 1, S), jnp.float32).at[1, :, :, S - 3:].set(0.0)

    # one-time parameter packing (hoisted out of the forward hot path)
    wslab = jax.block_until_ready(pack_decoder_params(params))

    out, attn = decoder_layer(trg, enc_src, trg_mask, src_mask, wslab)
    out = jax.block_until_ready(out)
    attn = jax.block_until_ready(attn)

    ref_out, ref_attn = ref_decoder_layer(trg, enc_src, trg_mask, src_mask, params)
    np.testing.assert_allclose(np.asarray(out), np.asarray(ref_out),
                               rtol=2e-3, atol=2e-3)
    np.testing.assert_allclose(np.asarray(attn), np.asarray(ref_attn),
                               rtol=2e-3, atol=2e-3)
    print("KERNEL_OK")
</pallas_src>

<mosaic_0001>
module attributes {stable_mosaic.version = 11 : i64} {
  func.func @decoder_layer_kernel(%arg0: i32, %arg1: memref<1x8x32xf32, #tpu.memory_space<vmem>>, %arg2: memref<1x12x32xf32, #tpu.memory_space<vmem>>, %arg3: memref<1x8x8xf32, #tpu.memory_space<vmem>>, %arg4: memref<1x1x12xf32, #tpu.memory_space<vmem>>, %arg5: memref<176x128xf32, #tpu.memory_space<vmem>>, %arg6: memref<8x128xf32, #tpu.memory_space<vmem>>) attributes {dimension_semantics = [#tpu.dimension_semantics<parallel>], iteration_bounds = array<i64: 2>, scalar_prefetch = 0 : i64, scratch_operands = 0 : i64, tpu.core_type = #tpu.core_type<tc>, window_params = [{transform_indices = @transform_0, window_bounds = array<i64: 1, 8, 32>}, {transform_indices = @transform_1, window_bounds = array<i64: 1, 12, 32>}, {transform_indices = @transform_2, window_bounds = array<i64: 1, 8, 8>}, {transform_indices = @transform_3, window_bounds = array<i64: 1, 1, 12>}, {pipeline_mode = #tpu.pipeline_mode<synchronous>, transform_indices = @transform_4, window_bounds = array<i64: 176, 128>}, {transform_indices = @transform_5, window_bounds = array<i64: 8, 128>}]} {
    %c0 = arith.constant 0 : index
    %c0_0 = arith.constant 0 : index
    %c0_1 = arith.constant 0 : index
    %0 = vector.load %arg1[%c0, %c0_0, %c0_1] : memref<1x8x32xf32, #tpu.memory_space<vmem>>, vector<1x8x32xf32>
    %1 = vector.shape_cast %0 : vector<1x8x32xf32> to vector<8x32xf32>
    %c0_2 = arith.constant 0 : index
    %c0_3 = arith.constant 0 : index
    %c0_4 = arith.constant 0 : index
    %2 = vector.load %arg2[%c0_2, %c0_3, %c0_4] : memref<1x12x32xf32, #tpu.memory_space<vmem>>, vector<1x12x32xf32>
    %3 = vector.shape_cast %2 : vector<1x12x32xf32> to vector<12x32xf32>
    %c0_5 = arith.constant 0 : index
    %c0_6 = arith.constant 0 : index
    %4 = vector.load %arg5[%c0_5, %c0_6] : memref<176x128xf32, #tpu.memory_space<vmem>>, vector<176x128xf32>
    %5 = vector.extract_strided_slice %4 {offsets = [0, 0], sizes = [32, 128], strides = [1, 1]} : vector<176x128xf32> to vector<32x128xf32>
    %6 = vector.extract_strided_slice %4 {offsets = [32, 0], sizes = [32, 128], strides = [1, 1]} : vector<176x128xf32> to vector<32x128xf32>
    %7 = vector.extract_strided_slice %4 {offsets = [64, 0], sizes = [32, 128], strides = [1, 1]} : vector<176x128xf32> to vector<32x128xf32>
    %8 = vector.extract_strided_slice %4 {offsets = [96, 0], sizes = [64, 32], strides = [1, 1]} : vector<176x128xf32> to vector<64x32xf32>
    %9 = vector.extract_strided_slice %4 {offsets = [160, 0], sizes = [1, 128], strides = [1, 1]} : vector<176x128xf32> to vector<1x128xf32>
    %10 = vector.extract_strided_slice %4 {offsets = [161, 0], sizes = [1, 128], strides = [1, 1]} : vector<176x128xf32> to vector<1x128xf32>
    %11 = vector.extract_strided_slice %4 {offsets = [162, 0], sizes = [1, 128], strides = [1, 1]} : vector<176x128xf32> to vector<1x128xf32>
    %12 = vector.extract_strided_slice %4 {offsets = [163, 0], sizes = [1, 32], strides = [1, 1]} : vector<176x128xf32> to vector<1x32xf32>
    %13 = vector.extract_strided_slice %4 {offsets = [164, 0], sizes = [1, 32], strides = [1, 1]} : vector<176x128xf32> to vector<1x32xf32>
    %14 = vector.extract_strided_slice %4 {offsets = [166, 0], sizes = [1, 32], strides = [1, 1]} : vector<176x128xf32> to vector<1x32xf32>
    %15 = vector.extract_strided_slice %4 {offsets = [168, 0], sizes = [1, 32], strides = [1, 1]} : vector<176x128xf32> to vector<1x32xf32>
    %16 = vector.extract_strided_slice %4 {offsets = [165, 0], sizes = [1, 32], strides = [1, 1]} : vector<176x128xf32> to vector<1x32xf32>
    %17 = vector.extract_strided_slice %4 {offsets = [167, 0], sizes = [1, 32], strides = [1, 1]} : vector<176x128xf32> to vector<1x32xf32>
    %18 = vector.extract_strided_slice %4 {offsets = [169, 0], sizes = [1, 32], strides = [1, 1]} : vector<176x128xf32> to vector<1x32xf32>
    %c0_7 = arith.constant 0 : index
    %c0_8 = arith.constant 0 : index
    %c0_9 = arith.constant 0 : index
    %19 = vector.load %arg3[%c0_7, %c0_8, %c0_9] : memref<1x8x8xf32, #tpu.memory_space<vmem>>, vector<1x8x8xf32>
    %20 = vector.shape_cast %19 : vector<1x8x8xf32> to vector<8x8xf32>
    %cst = arith.constant 0.000000e+00 : f32
    %21 = vector.broadcast %cst : f32 to vector<8x8xf32>
    %22 = arith.cmpf oeq, %20, %21 : vector<8x8xf32>
    %cst_10 = arith.constant -1.000000e+10 : f32
    %cst_11 = arith.constant 0.000000e+00 : f32
    %23 = vector.broadcast %cst_10 : f32 to vector<8x8xf32>
    %24 = vector.broadcast %cst_11 : f32 to vector<8x8xf32>
    %25 = arith.select %22, %23, %24 : vector<8x8xi1>, vector<8x8xf32>
    %c0_12 = arith.constant 0 : index
    %c0_13 = arith.constant 0 : index
    %c0_14 = arith.constant 0 : index
    %26 = vector.load %arg4[%c0_12, %c0_13, %c0_14] : memref<1x1x12xf32, #tpu.memory_space<vmem>>, vector<1x1x12xf32>
    %27 = vector.shape_cast %26 : vector<1x1x12xf32> to vector<1x12xf32>
    %cst_15 = arith.constant 0.000000e+00 : f32
    %28 = vector.broadcast %cst_15 : f32 to vector<1x12xf32>
    %29 = arith.cmpf oeq, %27, %28 : vector<1x12xf32>
    %cst_16 = arith.constant -1.000000e+10 : f32
    %cst_17 = arith.constant 0.000000e+00 : f32
    %30 = vector.broadcast %cst_16 : f32 to vector<1x12xf32>
    %31 = vector.broadcast %cst_17 : f32 to vector<1x12xf32>
    %32 = arith.select %29, %30, %31 : vector<1x12xi1>, vector<1x12xf32>
    %33 = vector.extract_strided_slice %5 {offsets = [0, 0], sizes = [32, 96], strides = [1, 1]} : vector<32x128xf32> to vector<32x96xf32>
    %cst_18 = arith.constant dense<0.000000e+00> : vector<8x96xf32>
    %34 = tpu.matmul %1, %33, %cst_18 {dimension_numbers = #tpu.dot_dimension_numbers<[1], [0], [0], [1], [0, 0, 1, 1], [], []>} : vector<8x32xf32>, vector<32x96xf32>, vector<8x96xf32> -> vector<8x96xf32>
    %35 = vector.extract_strided_slice %9 {offsets = [0, 0], sizes = [1, 96], strides = [1, 1]} : vector<1x128xf32> to vector<1x96xf32>
    %36 = vector.broadcast %35 : vector<1x96xf32> to vector<8x96xf32>
    %37 = arith.addf %34, %36 : vector<8x96xf32>
    %38 = vector.extract_strided_slice %37 {offsets = [0, 0], sizes = [8, 32], strides = [1, 1]} : vector<8x96xf32> to vector<8x32xf32>
    %39 = vector.extract_strided_slice %37 {offsets = [0, 32], sizes = [8, 32], strides = [1, 1]} : vector<8x96xf32> to vector<8x32xf32>
    %40 = vector.extract_strided_slice %37 {offsets = [0, 64], sizes = [8, 32], strides = [1, 1]} : vector<8x96xf32> to vector<8x32xf32>
    %41 = vector.shape_cast %38 : vector<8x32xf32> to vector<8x4x8xf32>
    %42 = tpu.transpose %41, [1, 0, 2] : vector<8x4x8xf32> -> vector<4x8x8xf32>
    %43 = vector.shape_cast %39 : vector<8x32xf32> to vector<8x4x8xf32>
    %44 = tpu.transpose %43, [1, 0, 2] : vector<8x4x8xf32> -> vector<4x8x8xf32>
    %45 = vector.shape_cast %40 : vector<8x32xf32> to vector<8x4x8xf32>
    %46 = tpu.transpose %45, [1, 0, 2] : vector<8x4x8xf32> -> vector<4x8x8xf32>
    "tpu.trace_start"() <{level = 10 : i32, message = "hqd,hkd->hqk"}> : () -> ()
    %cst_19 = arith.constant dense<0.000000e+00> : vector<4x8x8xf32>
    %47 = tpu.matmul %42, %44, %cst_19 {dimension_numbers = #tpu.dot_dimension_numbers<[2], [2], [1], [1], [0, 0, 0, 1, 1, 1], [0], [0]>} : vector<4x8x8xf32>, vector<4x8x8xf32>, vector<4x8x8xf32> -> vector<4x8x8xf32>
    "tpu.trace_stop"() : () -> ()
    %48 = vector.shape_cast %25 : vector<8x8xf32> to vector<1x8x8xf32>
    %49 = vector.broadcast %48 : vector<1x8x8xf32> to vector<4x8x8xf32>
    %50 = arith.addf %47, %49 : vector<4x8x8xf32>
    %cst_20 = arith.constant dense<0xFF800000> : vector<4x8xf32>
    %51 = vector.multi_reduction <maximumf>, %50, %cst_20 [2] : vector<4x8x8xf32> to vector<4x8xf32>
    %52 = vector.shape_cast %51 : vector<4x8xf32> to vector<4x8x1xf32>
    %53 = vector.broadcast %52 : vector<4x8x1xf32> to vector<4x8x8xf32>
    %54 = arith.subf %50, %53 : vector<4x8x8xf32>
    %55 = math.exp %54 : vector<4x8x8xf32>
    %cst_21 = arith.constant dense<0.000000e+00> : vector<4x8xf32>
    %56 = vector.multi_reduction <add>, %55, %cst_21 [2] : vector<4x8x8xf32> to vector<4x8xf32>
    %57 = vector.shape_cast %56 : vector<4x8xf32> to vector<4x8x1xf32>
    %58 = vector.broadcast %57 : vector<4x8x1xf32> to vector<4x8x8xf32>
    %59 = arith.divf %55, %58 : vector<4x8x8xf32>
    "tpu.trace_start"() <{level = 10 : i32, message = "hqk,hkd->hqd"}> : () -> ()
    %cst_22 = arith.constant dense<0.000000e+00> : vector<4x8x8xf32>
    %60 = tpu.matmul %59, %46, %cst_22 {dimension_numbers = #tpu.dot_dimension_numbers<[2], [1], [1], [2], [0, 0, 0, 1, 1, 2], [0], [0]>} : vector<4x8x8xf32>, vector<4x8x8xf32>, vector<4x8x8xf32> -> vector<4x8x8xf32>
    "tpu.trace_stop"() : () -> ()
    %61 = tpu.transpose %60, [1, 0, 2] : vector<4x8x8xf32> -> vector<8x4x8xf32>
    %62 = vector.shape_cast %61 : vector<8x4x8xf32> to vector<8x32xf32>
    %63 = vector.extract_strided_slice %5 {offsets = [0, 96], sizes = [32, 32], strides = [1, 1]} : vector<32x128xf32> to vector<32x32xf32>
    %cst_23 = arith.constant dense<0.000000e+00> : vector<8x32xf32>
    %64 = tpu.matmul %62, %63, %cst_23 {dimension_numbers = #tpu.dot_dimension_numbers<[1], [0], [0], [1], [0, 0, 1, 1], [], []>} : vector<8x32xf32>, vector<32x32xf32>, vector<8x32xf32> -> vector<8x32xf32>
    %65 = vector.extract_strided_slice %9 {offsets = [0, 96], sizes = [1, 32], strides = [1, 1]} : vector<1x128xf32> to vector<1x32xf32>
    %66 = vector.broadcast %65 : vector<1x32xf32> to vector<8x32xf32>
    %67 = arith.addf %64, %66 : vector<8x32xf32>
    %68 = arith.addf %1, %67 : vector<8x32xf32>
    %cst_24 = arith.constant dense<0.000000e+00> : vector<8xf32>
    %69 = vector.multi_reduction <add>, %68, %cst_24 [1] : vector<8x32xf32> to vector<8xf32>
    %70 = vector.shape_cast %69 : vector<8xf32> to vector<8x1xf32>
    %cst_25 = arith.constant 3.200000e+01 : f32
    %71 = vector.broadcast %cst_25 : f32 to vector<8x1xf32>
    %72 = arith.divf %70, %71 : vector<8x1xf32>
    %73 = vector.broadcast %72 : vector<8x1xf32> to vector<8x32xf32>
    %74 = arith.subf %68, %73 : vector<8x32xf32>
    %75 = arith.mulf %74, %74 : vector<8x32xf32>
    %cst_26 = arith.constant dense<0.000000e+00> : vector<8xf32>
    %76 = vector.multi_reduction <add>, %75, %cst_26 [1] : vector<8x32xf32> to vector<8xf32>
    %77 = vector.shape_cast %76 : vector<8xf32> to vector<8x1xf32>
    %cst_27 = arith.constant 3.200000e+01 : f32
    %78 = vector.broadcast %cst_27 : f32 to vector<8x1xf32>
    %79 = arith.divf %77, %78 : vector<8x1xf32>
    %cst_28 = arith.constant 9.99999974E-6 : f32
    %80 = vector.broadcast %cst_28 : f32 to vector<8x1xf32>
    %81 = arith.addf %79, %80 : vector<8x1xf32>
    %82 = math.rsqrt %81 : vector<8x1xf32>
    %83 = vector.broadcast %82 : vector<8x1xf32> to vector<8x32xf32>
    %84 = arith.mulf %74, %83 : vector<8x32xf32>
    %85 = vector.broadcast %13 : vector<1x32xf32> to vector<8x32xf32>
    %86 = arith.mulf %84, %85 : vector<8x32xf32>
    %87 = vector.broadcast %16 : vector<1x32xf32> to vector<8x32xf32>
    %88 = arith.addf %86, %87 : vector<8x32xf32>
    %89 = vector.extract_strided_slice %6 {offsets = [0, 0], sizes = [32, 32], strides = [1, 1]} : vector<32x128xf32> to vector<32x32xf32>
    %cst_29 = arith.constant dense<0.000000e+00> : vector<8x32xf32>
    %90 = tpu.matmul %88, %89, %cst_29 {dimension_numbers = #tpu.dot_dimension_numbers<[1], [0], [0], [1], [0, 0, 1, 1], [], []>} : vector<8x32xf32>, vector<32x32xf32>, vector<8x32xf32> -> vector<8x32xf32>
    %91 = vector.extract_strided_slice %10 {offsets = [0, 0], sizes = [1, 32], strides = [1, 1]} : vector<1x128xf32> to vector<1x32xf32>
    %92 = vector.broadcast %91 : vector<1x32xf32> to vector<8x32xf32>
    %93 = arith.addf %90, %92 : vector<8x32xf32>
    %94 = vector.extract_strided_slice %6 {offsets = [0, 32], sizes = [32, 64], strides = [1, 1]} : vector<32x128xf32> to vector<32x64xf32>
    %cst_30 = arith.constant dense<0.000000e+00> : vector<12x64xf32>
    %95 = tpu.matmul %3, %94, %cst_30 {dimension_numbers = #tpu.dot_dimension_numbers<[1], [0], [0], [1], [0, 0, 1, 1], [], []>} : vector<12x32xf32>, vector<32x64xf32>, vector<12x64xf32> -> vector<12x64xf32>
    %96 = vector.extract_strided_slice %10 {offsets = [0, 32], sizes = [1, 64], strides = [1, 1]} : vector<1x128xf32> to vector<1x64xf32>
    %97 = vector.broadcast %96 : vector<1x64xf32> to vector<12x64xf32>
    %98 = arith.addf %95, %97 : vector<12x64xf32>
    %99 = vector.extract_strided_slice %98 {offsets = [0, 0], sizes = [12, 32], strides = [1, 1]} : vector<12x64xf32> to vector<12x32xf32>
    %100 = vector.extract_strided_slice %98 {offsets = [0, 32], sizes = [12, 32], strides = [1, 1]} : vector<12x64xf32> to vector<12x32xf32>
    %101 = vector.shape_cast %93 : vector<8x32xf32> to vector<8x4x8xf32>
    %102 = tpu.transpose %101, [1, 0, 2] : vector<8x4x8xf32> -> vector<4x8x8xf32>
    %103 = vector.shape_cast %99 : vector<12x32xf32> to vector<12x4x8xf32>
    %104 = tpu.transpose %103, [1, 0, 2] : vector<12x4x8xf32> -> vector<4x12x8xf32>
    %105 = vector.shape_cast %100 : vector<12x32xf32> to vector<12x4x8xf32>
    %106 = tpu.transpose %105, [1, 0, 2] : vector<12x4x8xf32> -> vector<4x12x8xf32>
    "tpu.trace_start"() <{level = 10 : i32, message = "hqd,hkd->hqk"}> : () -> ()
    %cst_31 = arith.constant dense<0.000000e+00> : vector<4x8x12xf32>
    %107 = tpu.matmul %102, %104, %cst_31 {dimension_numbers = #tpu.dot_dimension_numbers<[2], [2], [1], [1], [0, 0, 0, 1, 1, 1], [0], [0]>} : vector<4x8x8xf32>, vector<4x12x8xf32>, vector<4x8x12xf32> -> vector<4x8x12xf32>
    "tpu.trace_stop"() : () -> ()
    %108 = vector.shape_cast %32 : vector<1x12xf32> to vector<1x1x12xf32>
    %109 = vector.broadcast %108 : vector<1x1x12xf32> to vector<4x8x12xf32>
    %110 = arith.addf %107, %109 : vector<4x8x12xf32>
    %cst_32 = arith.constant dense<0xFF800000> : vector<4x8xf32>
    %111 = vector.multi_reduction <maximumf>, %110, %cst_32 [2] : vector<4x8x12xf32> to vector<4x8xf32>
    %112 = vector.shape_cast %111 : vector<4x8xf32> to vector<4x8x1xf32>
    %113 = vector.broadcast %112 : vector<4x8x1xf32> to vector<4x8x12xf32>
    %114 = arith.subf %110, %113 : vector<4x8x12xf32>
    %115 = math.exp %114 : vector<4x8x12xf32>
    %cst_33 = arith.constant dense<0.000000e+00> : vector<4x8xf32>
    %116 = vector.multi_reduction <add>, %115, %cst_33 [2] : vector<4x8x12xf32> to vector<4x8xf32>
    %117 = vector.shape_cast %116 : vector<4x8xf32> to vector<4x8x1xf32>
    %118 = vector.broadcast %117 : vector<4x8x1xf32> to vector<4x8x12xf32>
    %119 = arith.divf %115, %118 : vector<4x8x12xf32>
    "tpu.trace_start"() <{level = 10 : i32, message = "hqk,hkd->hqd"}> : () -> ()
    %cst_34 = arith.constant dense<0.000000e+00> : vector<4x8x8xf32>
    %120 = tpu.matmul %119, %106, %cst_34 {dimension_numbers = #tpu.dot_dimension_numbers<[2], [1], [1], [2], [0, 0, 0, 1, 1, 2], [0], [0]>} : vector<4x8x12xf32>, vector<4x12x8xf32>, vector<4x8x8xf32> -> vector<4x8x8xf32>
    "tpu.trace_stop"() : () -> ()
    %121 = tpu.transpose %120, [1, 0, 2] : vector<4x8x8xf32> -> vector<8x4x8xf32>
    %122 = vector.shape_cast %121 : vector<8x4x8xf32> to vector<8x32xf32>
    %123 = vector.extract_strided_slice %6 {offsets = [0, 96], sizes = [32, 32], strides = [1, 1]} : vector<32x128xf32> to vector<32x32xf32>
    %cst_35 = arith.constant dense<0.000000e+00> : vector<8x32xf32>
    %124 = tpu.matmul %122, %123, %cst_35 {dimension_numbers = #tpu.dot_dimension_numbers<[1], [0], [0], [1], [0, 0, 1, 1], [], []>} : vector<8x32xf32>, vector<32x32xf32>, vector<8x32xf32> -> vector<8x32xf32>
    %125 = vector.extract_strided_slice %10 {offsets = [0, 96], sizes = [1, 32], strides = [1, 1]} : vector<1x128xf32> to vector<1x32xf32>
    %126 = vector.broadcast %125 : vector<1x32xf32> to vector<8x32xf32>
    %127 = arith.addf %124, %126 : vector<8x32xf32>
    %128 = arith.addf %88, %127 : vector<8x32xf32>
    %cst_36 = arith.constant dense<0.000000e+00> : vector<8xf32>
    %129 = vector.multi_reduction <add>, %128, %cst_36 [1] : vector<8x32xf32> to vector<8xf32>
    %130 = vector.shape_cast %129 : vector<8xf32> to vector<8x1xf32>
    %cst_37 = arith.constant 3.200000e+01 : f32
    %131 = vector.broadcast %cst_37 : f32 to vector<8x1xf32>
    %132 = arith.divf %130, %131 : vector<8x1xf32>
    %133 = vector.broadcast %132 : vector<8x1xf32> to vector<8x32xf32>
    %134 = arith.subf %128, %133 : vector<8x32xf32>
    %135 = arith.mulf %134, %134 : vector<8x32xf32>
    %cst_38 = arith.constant dense<0.000000e+00> : vector<8xf32>
    %136 = vector.multi_reduction <add>, %135, %cst_38 [1] : vector<8x32xf32> to vector<8xf32>
    %137 = vector.shape_cast %136 : vector<8xf32> to vector<8x1xf32>
    %cst_39 = arith.constant 3.200000e+01 : f32
    %138 = vector.broadcast %cst_39 : f32 to vector<8x1xf32>
    %139 = arith.divf %137, %138 : vector<8x1xf32>
    %cst_40 = arith.constant 9.99999974E-6 : f32
    %140 = vector.broadcast %cst_40 : f32 to vector<8x1xf32>
    %141 = arith.addf %139, %140 : vector<8x1xf32>
    %142 = math.rsqrt %141 : vector<8x1xf32>
    %143 = vector.broadcast %142 : vector<8x1xf32> to vector<8x32xf32>
    %144 = arith.mulf %134, %143 : vector<8x32xf32>
    %145 = vector.broadcast %14 : vector<1x32xf32> to vector<8x32xf32>
    %146 = arith.mulf %144, %145 : vector<8x32xf32>
    %147 = vector.broadcast %17 : vector<1x32xf32> to vector<8x32xf32>
    %148 = arith.addf %146, %147 : vector<8x32xf32>
    %cst_41 = arith.constant dense<0.000000e+00> : vector<8x128xf32>
    %149 = tpu.matmul %148, %7, %cst_41 {dimension_numbers = #tpu.dot_dimension_numbers<[1], [0], [0], [1], [0, 0, 1, 1], [], []>} : vector<8x32xf32>, vector<32x128xf32>, vector<8x128xf32> -> vector<8x128xf32>
    %150 = vector.broadcast %11 : vector<1x128xf32> to vector<8x128xf32>
    %151 = arith.addf %149, %150 : vector<8x128xf32>
    %cst_42 = arith.constant 0.000000e+00 : f32
    %152 = vector.broadcast %cst_42 : f32 to vector<8x128xf32>
    %153 = arith.maximumf %151, %152 : vector<8x128xf32>
    %154 = vector.extract_strided_slice %153 {offsets = [0, 0], sizes = [8, 64], strides = [1, 1]} : vector<8x128xf32> to vector<8x64xf32>
    %cst_43 = arith.constant dense<0.000000e+00> : vector<8x32xf32>
    %155 = tpu.matmul %154, %8, %cst_43 {dimension_numbers = #tpu.dot_dimension_numbers<[1], [0], [0], [1], [0, 0, 1, 1], [], []>} : vector<8x64xf32>, vector<64x32xf32>, vector<8x32xf32> -> vector<8x32xf32>
    %156 = vector.broadcast %12 : vector<1x32xf32> to vector<8x32xf32>
    %157 = arith.addf %155, %156 : vector<8x32xf32>
    %158 = arith.addf %148, %157 : vector<8x32xf32>
    %cst_44 = arith.constant dense<0.000000e+00> : vector<8xf32>
    %159 = vector.multi_reduction <add>, %158, %cst_44 [1] : vector<8x32xf32> to vector<8xf32>
    %160 = vector.shape_cast %159 : vector<8xf32> to vector<8x1xf32>
    %cst_45 = arith.constant 3.200000e+01 : f32
    %161 = vector.broadcast %cst_45 : f32 to vector<8x1xf32>
    %162 = arith.divf %160, %161 : vector<8x1xf32>
    %163 = vector.broadcast %162 : vector<8x1xf32> to vector<8x32xf32>
    %164 = arith.subf %158, %163 : vector<8x32xf32>
    %165 = arith.mulf %164, %164 : vector<8x32xf32>
    %cst_46 = arith.constant dense<0.000000e+00> : vector<8xf32>
    %166 = vector.multi_reduction <add>, %165, %cst_46 [1] : vector<8x32xf32> to vector<8xf32>
    %167 = vector.shape_cast %166 : vector<8xf32> to vector<8x1xf32>
    %cst_47 = arith.constant 3.200000e+01 : f32
    %168 = vector.broadcast %cst_47 : f32 to vector<8x1xf32>
    %169 = arith.divf %167, %168 : vector<8x1xf32>
    %cst_48 = arith.constant 9.99999974E-6 : f32
    %170 = vector.broadcast %cst_48 : f32 to vector<8x1xf32>
    %171 = arith.addf %169, %170 : vector<8x1xf32>
    %172 = math.rsqrt %171 : vector<8x1xf32>
    %173 = vector.broadcast %172 : vector<8x1xf32> to vector<8x32xf32>
    %174 = arith.mulf %164, %173 : vector<8x32xf32>
    %175 = vector.broadcast %15 : vector<1x32xf32> to vector<8x32xf32>
    %176 = arith.mulf %174, %175 : vector<8x32xf32>
    %177 = vector.broadcast %18 : vector<1x32xf32> to vector<8x32xf32>
    %178 = arith.addf %176, %177 : vector<8x32xf32>
    %179 = tpu.transpose %119, [1, 0, 2] : vector<4x8x12xf32> -> vector<8x4x12xf32>
    %180 = vector.shape_cast %179 : vector<8x4x12xf32> to vector<8x48xf32>
    %cst_49 = arith.constant 0.000000e+00 : f32
    %181 = vector.broadcast %cst_49 : f32 to vector<8x48xf32>
    %182 = tpu.concatenate %178, %180, %181 in 1 : vector<8x32xf32>, vector<8x48xf32>, vector<8x48xf32> -> vector<8x128xf32>
    %c0_50 = arith.constant 0 : index
    %c0_51 = arith.constant 0 : index
    %183 = vector.load %arg6[%c0_50, %c0_51] : memref<8x128xf32, #tpu.memory_space<vmem>>, vector<8x128xf32>
    tpu.vector_store %arg6[%c0_50, %c0_51], %182 {strides = array<i32>} : memref<8x128xf32, #tpu.memory_space<vmem>>, vector<8x128xf32>,
    return
  }
  func.func @transform_0(%arg0: i32) -> (i32, i32, i32) {
    %c0_i32 = arith.constant 0 : i32
    %c0_i32_0 = arith.constant 0 : i32
    %c0_i32_1 = arith.constant 0 : i32
    return %arg0, %c0_i32, %c0_i32_0 : i32, i32, i32
  }
  func.func @transform_1(%arg0: i32) -> (i32, i32, i32) {
    %c0_i32 = arith.constant 0 : i32
    %c0_i32_0 = arith.constant 0 : i32
    %c0_i32_1 = arith.constant 0 : i32
    return %arg0, %c0_i32, %c0_i32_0 : i32, i32, i32
  }
  func.func @transform_2(%arg0: i32) -> (i32, i32, i32) {
    %c0_i32 = arith.constant 0 : i32
    %c0_i32_0 = arith.constant 0 : i32
    %c0_i32_1 = arith.constant 0 : i32
    return %arg0, %c0_i32, %c0_i32_0 : i32, i32, i32
  }
  func.func @transform_3(%arg0: i32) -> (i32, i32, i32) {
    %c0_i32 = arith.constant 0 : i32
    %c0_i32_0 = arith.constant 0 : i32
    %c0_i32_1 = arith.constant 0 : i32
    return %arg0, %c0_i32, %c0_i32_0 : i32, i32, i32
  }
  func.func @transform_4(%arg0: i32) -> (i32, i32) {
    %c0_i32 = arith.constant 0 : i32
    %c0_i32_0 = arith.constant 0 : i32
    %c0_i32_1 = arith.constant 0 : i32
    return %c0_i32, %c0_i32_0 : i32, i32
  }
  func.func @transform_5(%arg0: i32) -> (i32, i32) {
    %c0_i32 = arith.constant 0 : i32
    %c0_i32_0 = arith.constant 0 : i32
    return %arg0, %c0_i32 : i32, i32
  }
}

</mosaic_0001>

<llo_original>
// kernel: decoder_layer.1
$region0: #{decoder_layer.1}
  #allocation0 [shape = 'u32[]', space=smem, size = 0x4, offset = 0x4, fixed_abs, tag = 'smem constant byte address 0x4 - core index']
  #allocation1 [shape = 'u32[72,128]{1,0:T(1,128)}', space=vmem, size = 0x9000, scoped, tag = 'internal scratch']
  %s0 = inlined_call_operand.vmem [shape: f32[2,8,32], index: 0, kind: input, shape index: {}]
  %s1 = inlined_call_operand.vmem [shape: f32[2,12,32], index: 1, kind: input, shape index: {}]
  %s2 = inlined_call_operand.vmem [shape: f32[2,8,8], index: 2, kind: input, shape index: {}]
  %s3 = inlined_call_operand.vmem [shape: f32[2,1,12], index: 3, kind: input, shape index: {}]
  %s4 = inlined_call_operand.hbm [shape: f32[176,128], index: 4, kind: input, shape index: {}]
  %s5 = inlined_call_operand.vmem [shape: f32[16,128], index: 5, kind: output, shape index: {}]
  %s6 = sld [smem:[#allocation0]]
  $region57: #{decoder_layer.1} parent=0
    _
  %s8 = ssub.s32 1, %s6
  %s9 = scalar_select 0, %s8, %s6
  $region1: #{decoder_layer.1} parent=0
    #allocation2 [shape = 'u8[90112]{0}', space=vmem, size = 0x16000, scoped, tag = 'input window, operand 4, single buffered']
    #allocation3 [shape = 's32[2]{0}', space=sflag, size = 0x8, scoped, tag = 'scoped memory for decoder_layer.1']
    %10 = vsyncpa [#allocation3], 0
    loop: start=0, step=1, limit=4
    $region2: #{decoder_layer.1} parent=1 // loop_pre_header
      _
    $region3: #{decoder_layer.1} parent=1 // loop_header
      %s12 = sphi 0, %s16
      %p13 = scmp.ge.s32.totalorder %s12, 4
      %s22 = sphi 0, %s24
      %s25 = sphi 0, %s22
      %s26 = sphi 0, %s25
      %s42 = sphi 0, %s26
      %s48 = sphi 0, %s50
      %s51 = sphi 0, %s48
      %s52 = sphi 0, %s51
      %s68 = sphi 0, %s52
      %s74 = sphi 0, %s76
      %s77 = sphi 0, %s74
      %s78 = sphi 0, %s77
      %s94 = sphi 0, %s78
      %s100 = sphi 0, %s102
      %s103 = sphi 0, %s100
      %s104 = sphi 0, %s103
      %s120 = sphi 0, %s104
      %s124 = sphi 0, %s124
      %s126 = sphi 0, %s124
      %s127 = sphi 0, %s126
      %s141 = sphi 0, %s127
      %s147 = sphi 0, %s149
      %s150 = sphi 0, %s147
      %s151 = sphi 0, %s150
      %s167 = sphi 0, %s151
    $region4: #{decoder_layer.1} parent=1 // loop_header_branch
      %15 = sbr.rel (%p13) target = $region8
    $region5: #{decoder_layer.1} parent=1 // loop_body
      %s17 = ssub.s32 %s12, 1
      %s18 = ssub.s32 %s12, 2
      %s19 = sadd.s32 %s12, 1
      %s20 = ssub.s32 %s12, %s19
      %p21 = scmp.eq.s32.totalorder %s20, 0
      %s23 = sadd.s32 %s22, 1
      %s24 = scalar_select %p21, %s22, %s23
      %p27 = pneg %p21
      %p28 = scmp.eq.s32.totalorder %s12, 1
      %p29 = por %p27, %p28
      %p30 = scmp.ne.s32.totalorder %s22, %s25
      %p31 = scmp.eq.s32.totalorder %s12, 0
      %p32 = por %p30, %p31
      %p33 = scmp.ne.s32.totalorder %s22, %s25
      %p34 = scmp.eq.s32.totalorder %s17, 1
      %p35 = por %p33, %p34
      %p36 = scmp.ne.s32.totalorder %s25, %s26
      %p37 = scmp.eq.s32.totalorder %s17, 0
      %p38 = por %p36, %p37
      %p39 = scmp.ne.s32.totalorder %s25, %s26
      %p40 = scmp.eq.s32.totalorder %s18, 1
      %p41 = por %p39, %p40
      %p43 = scmp.ne.s32.totalorder %s26, %s42
      %p44 = scmp.eq.s32.totalorder %s18, 0
      %p45 = por %p43, %p44
      %s46 = ssub.s32 %s12, %s19
      %p47 = scmp.eq.s32.totalorder %s46, 0
      %s49 = sadd.s32 %s48, 1
      %s50 = scalar_select %p47, %s48, %s49
      %p53 = pneg %p47
      %p54 = scmp.eq.s32.totalorder %s12, 1
      %p55 = por %p53, %p54
      %p56 = scmp.ne.s32.totalorder %s48, %s51
      %p57 = scmp.eq.s32.totalorder %s12, 0
      %p58 = por %p56, %p57
      %p59 = scmp.ne.s32.totalorder %s48, %s51
      %p60 = scmp.eq.s32.totalorder %s17, 1
      %p61 = por %p59, %p60
      %p62 = scmp.ne.s32.totalorder %s51, %s52
      %p63 = scmp.eq.s32.totalorder %s17, 0
      %p64 = por %p62, %p63
      %p65 = scmp.ne.s32.totalorder %s51, %s52
      %p66 = scmp.eq.s32.totalorder %s18, 1
      %p67 = por %p65, %p66
      %p69 = scmp.ne.s32.totalorder %s52, %s68
      %p70 = scmp.eq.s32.totalorder %s18, 0
      %p71 = por %p69, %p70
      %s72 = ssub.s32 %s12, %s19
      %p73 = scmp.eq.s32.totalorder %s72, 0
      %s75 = sadd.s32 %s74, 1
      %s76 = scalar_select %p73, %s74, %s75
      %p79 = pneg %p73
      %p80 = scmp.eq.s32.totalorder %s12, 1
      %p81 = por %p79, %p80
      %p82 = scmp.ne.s32.totalorder %s74, %s77
      %p83 = scmp.eq.s32.totalorder %s12, 0
      %p84 = por %p82, %p83
      %p85 = scmp.ne.s32.totalorder %s74, %s77
      %p86 = scmp.eq.s32.totalorder %s17, 1
      %p87 = por %p85, %p86
      %p88 = scmp.ne.s32.totalorder %s77, %s78
      %p89 = scmp.eq.s32.totalorder %s17, 0
      %p90 = por %p88, %p89
      %p91 = scmp.ne.s32.totalorder %s77, %s78
      %p92 = scmp.eq.s32.totalorder %s18, 1
      %p93 = por %p91, %p92
      %p95 = scmp.ne.s32.totalorder %s78, %s94
      %p96 = scmp.eq.s32.totalorder %s18, 0
      %p97 = por %p95, %p96
      %s98 = ssub.s32 %s12, %s19
      %p99 = scmp.eq.s32.totalorder %s98, 0
      %s101 = sadd.s32 %s100, 1
      %s102 = scalar_select %p99, %s100, %s101
      %p105 = pneg %p99
      %p106 = scmp.eq.s32.totalorder %s12, 1
      %p107 = por %p105, %p106
      %p108 = scmp.ne.s32.totalorder %s100, %s103
      %p109 = scmp.eq.s32.totalorder %s12, 0
      %p110 = por %p108, %p109
      %p111 = scmp.ne.s32.totalorder %s100, %s103
      %p112 = scmp.eq.s32.totalorder %s17, 1
      %p113 = por %p111, %p112
      %p114 = scmp.ne.s32.totalorder %s103, %s104
      %p115 = scmp.eq.s32.totalorder %s17, 0
      %p116 = por %p114, %p115
      %p117 = scmp.ne.s32.totalorder %s103, %s104
      %p118 = scmp.eq.s32.totalorder %s18, 1
      %p119 = por %p117, %p118
      %p121 = scmp.ne.s32.totalorder %s104, %s120
      %p122 = scmp.eq.s32.totalorder %s18, 0
      %p123 = por %p121, %p122
      %s125 = sadd.s32 %s124, 1
      %p128 = scmp.eq.s32.totalorder %s12, 1
      %p129 = scmp.ne.s32.totalorder %s124, %s126
      %p130 = scmp.eq.s32.totalorder %s12, 0
      %p131 = por %p129, %p130
      %p132 = scmp.ne.s32.totalorder %s124, %s126
      %p133 = scmp.eq.s32.totalorder %s17, 1
      %p134 = por %p132, %p133
      %p135 = scmp.ne.s32.totalorder %s126, %s127
      %p136 = scmp.eq.s32.totalorder %s17, 0
      %p137 = por %p135, %p136
      %p138 = scmp.ne.s32.totalorder %s126, %s127
      %p139 = scmp.eq.s32.totalorder %s18, 1
      %p140 = por %p138, %p139
      %p142 = scmp.ne.s32.totalorder %s127, %s141
      %p143 = scmp.eq.s32.totalorder %s18, 0
      %p144 = por %p142, %p143
      %s145 = ssub.s32 %s12, %s19
      %p146 = scmp.eq.s32.totalorder %s145, 0
      %s148 = sadd.s32 %s147, 1
      %s149 = scalar_select %p146, %s147, %s148
      %p152 = pneg %p146
      %p153 = scmp.eq.s32.totalorder %s12, 1
      %p154 = por %p152, %p153
      %p155 = scmp.ne.s32.totalorder %s147, %s150
      %p156 = scmp.eq.s32.totalorder %s12, 0
      %p157 = por %p155, %p156
      %p158 = scmp.ne.s32.totalorder %s147, %s150
      %p159 = scmp.eq.s32.totalorder %s17, 1
      %p160 = por %p158, %p159
      %p161 = scmp.ne.s32.totalorder %s150, %s151
      %p162 = scmp.eq.s32.totalorder %s17, 0
      %p163 = por %p161, %p162
      %p164 = scmp.ne.s32.totalorder %s150, %s151
      %p165 = scmp.eq.s32.totalorder %s18, 1
      %p166 = por %p164, %p165
      %p168 = scmp.ne.s32.totalorder %s151, %s167
      %p169 = scmp.eq.s32.totalorder %s18, 0
      %p170 = por %p168, %p169
      %p171 = scmp.le.s32.totalorder 1, %s12
      %p172 = scmp.lt.s32.totalorder %s12, 3
      %p173 = pnand %p171, %p172
      %p174 = pneg %p173
      // Predicated region
      $region9: #{decoder_layer.1} parent=5 // pred_check
        _
      $region10: #{decoder_layer.1} parent=5 // pred_check_branch
        %176 = sbr.rel (%p173) target = $region12
      $region11: #{decoder_layer.1} parent=5 // pred_region
        %s177 = ssub.s32 %s12, 1
        // Predicated region
        $region13: #{decoder_layer.1} parent=11 // pred_check
          %p178 = pneg %p137
        $region14: #{decoder_layer.1} parent=11 // pred_check_branch
          %180 = sbr.rel (%p178) target = $region16
        $region15: #{decoder_layer.1} parent=11 // pred_region
          %182 = vsyncadd [#allocation3], 0
          %s183 = sshll.u32 %s4, 4
          %s184 = int_to_ptr.hbm [resolvable:$true] %s183
          %s185 = sshll.u32 [#allocation2], 4
          %s186 = int_to_ptr.vmem [resolvable:$true] %s185
          %191 = dma.hbm_to_vmem [thread:$0]  %s184, 2816, %s186, [#allocation3], 128, 128, 8
        $region16: #{decoder_layer.1} parent=11 // pred_fallthru
          _
      $region12: #{decoder_layer.1} parent=5 // pred_fallthru
        _
      %p192 = scmp.lt.s32.totalorder %s12, 2
      // Predicated region
      $region17: #{decoder_layer.1} parent=5 // pred_check
        %p193 = pneg %p192
      $region18: #{decoder_layer.1} parent=5 // pred_check_branch
        %195 = sbr.rel (%p193) target = $region20
      $region19: #{decoder_layer.1} parent=5 // pred_region
        // Predicated region
        $region21: #{decoder_layer.1} parent=19 // pred_check
          %p196 = pneg %p32
        $region22: #{decoder_layer.1} parent=19 // pred_check_branch
          %198 = sbr.rel (%p196) target = $region24
        $region23: #{decoder_layer.1} parent=19 // pred_region
          %p199 = scmp.lt.s32.totalorder %s12, 1
          %s200 = scalar_select %p199, %s12, 1
          %s201 = smul.addr %s200, 8
          %s202 = scalar_lea.vmem %s0, %s201
        $region24: #{decoder_layer.1} parent=19 // pred_fallthru
          _
        // Predicated region
        $region25: #{decoder_layer.1} parent=19 // pred_check
          %p203 = pneg %p58
        $region26: #{decoder_layer.1} parent=19 // pred_check_branch
          %205 = sbr.rel (%p203) target = $region28
        $region27: #{decoder_layer.1} parent=19 // pred_region
          %p206 = scmp.lt.s32.totalorder %s12, 1
          %s207 = scalar_select %p206, %s12, 1
          %s208 = smul.addr %s207, 2
          %s209 = smul.addr %s208, 8
          %s210 = scalar_lea.vmem %s1, %s209
        $region28: #{decoder_layer.1} parent=19 // pred_fallthru
          _
        // Predicated region
        $region29: #{decoder_layer.1} parent=19 // pred_check
          %p211 = pneg %p84
        $region30: #{decoder_layer.1} parent=19 // pred_check_branch
          %213 = sbr.rel (%p211) target = $region32
        $region31: #{decoder_layer.1} parent=19 // pred_region
          %p214 = scmp.lt.s32.totalorder %s12, 1
          %s215 = scalar_select %p214, %s12, 1
          %s216 = smul.addr %s215, 8
          %s217 = scalar_lea.vmem %s2, %s216
        $region32: #{decoder_layer.1} parent=19 // pred_fallthru
          _
        // Predicated region
        $region33: #{decoder_layer.1} parent=19 // pred_check
          %p218 = pneg %p110
        $region34: #{decoder_layer.1} parent=19 // pred_check_branch
          %220 = sbr.rel (%p218) target = $region36
        $region35: #{decoder_layer.1} parent=19 // pred_region
          %p221 = scmp.lt.s32.totalorder %s12, 1
          %s222 = scalar_select %p221, %s12, 1
          %s223 = scalar_lea.vmem %s3, %s222
        $region36: #{decoder_layer.1} parent=19 // pred_fallthru
          _
      $region20: #{decoder_layer.1} parent=5 // pred_fallthru
        _
      %p224 = scmp.le.s32.totalorder 1, %s12
      %p225 = scmp.lt.s32.totalorder %s12, 3
      %p226 = pnand %p224, %p225
      %p227 = pneg %p226
      // Predicated region
      $region37: #{decoder_layer.1} parent=5 // pred_check
        _
      $region38: #{decoder_layer.1} parent=5 // pred_check_branch
        %229 = sbr.rel (%p226) target = $region40
      $region39: #{decoder_layer.1} parent=5 // pred_region
        %s230 = ssub.s32 %s12, 1
        // Predicated region
        $region41: #{decoder_layer.1} parent=39 // pred_check
          %p231 = pneg %p137
        $region42: #{decoder_layer.1} parent=39 // pred_check_branch
          %233 = sbr.rel (%p231) target = $region44
        $region43: #{decoder_layer.1} parent=39 // pred_region
          %235 = dma.done [#allocation3], 2816
        $region44: #{decoder_layer.1} parent=39 // pred_fallthru
          _
        %p236 = scmp.lt.s32.totalorder %s17, 1
        %s237 = scalar_select %p236, %s17, 1
        %s238 = smul.addr %s237, 8
        %s239 = scalar_lea.vmem %s0, %s238
        %p240 = pneg %p38
        %p241 = pneg %p35
        %p242 = scmp.lt.s32.totalorder %s17, 1
        %s243 = scalar_select %p242, %s17, 1
        %s244 = smul.addr %s243, 2
        %s245 = smul.addr %s244, 8
        %s246 = scalar_lea.vmem %s1, %s245
        %p247 = pneg %p64
        %p248 = pneg %p61
        %p249 = scmp.lt.s32.totalorder %s17, 1
        %s250 = scalar_select %p249, %s17, 1
        %s251 = smul.addr %s250, 8
        %s252 = scalar_lea.vmem %s2, %s251
        %p253 = pneg %p90
        %p254 = pneg %p87
        %p255 = scmp.lt.s32.totalorder %s17, 1
        %s256 = scalar_select %p255, %s17, 1
        %s257 = scalar_lea.vmem %s3, %s256
        %p258 = pneg %p116
        %p259 = pneg %p113
        %p260 = pneg %p137
        %p261 = pneg %p134
        %p262 = pneg %p163
        %p263 = pneg %p160
        %p264 = scmp.lt.s32.totalorder %s17, 1
        %s265 = scalar_select %p264, %s17, 1
        %s266 = smul.addr %s265, 8
        %s267 = scalar_lea.vmem %s5, %s266
        %p268 = scmp.lt.s32.totalorder %s17, 1
        %s269 = scalar_select %p268, %s17, 1
        %s270 = smul.addr %s269, 8
        %s271 = scalar_lea.vmem %s0, %s270
        %p272 = scmp.lt.s32.totalorder %s17, 1
        %s273 = scalar_select %p272, %s17, 1
        %s274 = smul.addr %s273, 2
        %s275 = smul.addr %s274, 8
        %s276 = scalar_lea.vmem %s1, %s275
        %p277 = scmp.lt.s32.totalorder %s17, 1
        %s278 = scalar_select %p277, %s17, 1
        %s279 = smul.addr %s278, 8
        %s280 = scalar_lea.vmem %s2, %s279
        %p281 = scmp.lt.s32.totalorder %s17, 1
        %s282 = scalar_select %p281, %s17, 1
        %s283 = scalar_lea.vmem %s3, %s282
        %p284 = scmp.lt.s32.totalorder %s17, 1
        %s285 = scalar_select %p284, %s17, 1
        %s286 = smul.addr %s285, 8
        %s287 = scalar_lea.vmem %s5, %s286
        %v288 = vld [vmem:[%s271] sm:$0xff]
        %v289 = vld [vmem:[%s276] sm:$0xff]
        %v290 = vld [vmem:[%s276 + $0x8] sm:$0xf]
        %v291 = vld [vmem:[#allocation2] sm:$0xff]
        %v292 = vld [vmem:[#allocation2 + $0x8] sm:$0xff]
        %v293 = vld [vmem:[#allocation2 + $0x10] sm:$0xff]
        %v294 = vld [vmem:[#allocation2 + $0x18] sm:$0xff]
        %v295 = vld [vmem:[#allocation2 + $0x20] sm:$0xff]
        %v296 = vld [vmem:[#allocation2 + $0x28] sm:$0xff]
        %v297 = vld [vmem:[#allocation2 + $0x30] sm:$0xff]
        %v298 = vld [vmem:[#allocation2 + $0x38] sm:$0xff]
        %v299 = vld [vmem:[#allocation2 + $0x40] sm:$0xff]
        %v300 = vld [vmem:[#allocation2 + $0x48] sm:$0xff]
        %v301 = vld [vmem:[#allocation2 + $0x50] sm:$0xff]
        %v302 = vld [vmem:[#allocation2 + $0x58] sm:$0xff]
        %v303 = vld [vmem:[#allocation2 + $0x60] sm:$0xff]
        %v304 = vld [vmem:[#allocation2 + $0x68] sm:$0xff]
        %v305 = vld [vmem:[#allocation2 + $0x70] sm:$0xff]
        %v306 = vld [vmem:[#allocation2 + $0x78] sm:$0xff]
        %v307 = vld [vmem:[#allocation2 + $0x80] sm:$0xff]
        %v308 = vld [vmem:[#allocation2 + $0x88] sm:$0xff]
        %v309 = vld [vmem:[#allocation2 + $0x90] sm:$0xff]
        %v310 = vld [vmem:[#allocation2 + $0x98] sm:$0xff]
        %v311 = vld [vmem:[#allocation2 + $0xa0] sm:$0xff]
        %v312 = vld [vmem:[#allocation2 + $0xa8] sm:$0xff]
        %v313 = vld [vmem:[%s280] sm:$0xff]
        %vm314 = vcmp.eq.f32.partialorder %v313, 0.0
        %v315 = vsel %vm314, -1e+10, 0.0
        %v316 = vld [vmem:[%s283] sm:$0x1]
        %vm317 = vcmp.eq.f32.partialorder %v316, 0.0
        %v318 = vsel %vm317, -1e+10, 0.0
        %v319 = vperm.slane %v311, 0
        %vm320 = vcmask 261120
        %v322 = vsel %vm320, %v288, 0
        %324 = vmatpush.msra.mxu0 0.0
        %325 = vmatpush.msra.mxu0 0.0
        %326 = vmatpush.msra.mxu0 0.0
        %327 = vmatpush.msra.mxu0 0.0
        %328 = vmatpush.msra.mxu0 0.0
        %329 = vmatpush.msra.mxu0 0.0
        %330 = vmatpush.msra.mxu0 0.0
        %331 = vmatpush.msra.mxu0 0.0
        %332 = vmatpush.msra.mxu0 0.0
        %333 = vmatpush.msra.mxu0 0.0
        %334 = vmatpush.msra.mxu0 0.0
        %335 = vmatpush.msra.mxu0 0.0
        %336 = vmatpush.msra.mxu0 %v294
        %337 = vmatpush.msra.mxu0 %v293
        %338 = vmatpush.msra.mxu0 %v292
        %339 = vmatpush.msra.mxu0 %v291
        %340 = vmatmul.f32.gmra.mxu0 %v322
        %v341 = vpop.f32.mrf.mxu0
        %v342 = vadd.f32 %v319, %v341
        %343 = vdwg.mxu0
        %345 = vrot.lane.b32.xlu0 %v342, 120
        %v346 = vpop.permute.xlu0 %345
        %348 = vrot.lane.b32.xlu0 %v342, 112
        %v349 = vpop.permute.xlu0 %348
        %351 = vrot.lane.b32.xlu0 %v342, 104
        %v352 = vpop.permute.xlu0 %351
        %v354 = vrot.slane %v349, 4
        %vm355 = vcmask 1047556
        %v356 = vsel %vm355, %v354, %v342
        %v357 = vrot.slane %v342, 4
        %v358 = vsel %vm355, %v349, %v357
        %v360 = vunpack.c.l.s4 1983009808
        %v361 = vunpack.c.0.s8 %v360
        %v362 = vperm.slane %v356, %v361
        %v364 = vunpack.c.l.s4 1983009808
        %v365 = vunpack.c.0.s8 %v364
        %v366 = vperm.slane %v358, %v365
        %v367 = vrot.slane %v352, 4
        %v368 = vsel %vm355, %v367, %v346
        %v369 = vrot.slane %v346, 4
        %v370 = vsel %vm355, %v352, %v369
        %v372 = vunpack.c.l.s4 1983009808
        %v373 = vunpack.c.0.s8 %v372
        %v374 = vperm.slane %v368, %v373
        %v376 = vunpack.c.l.s4 1983009808
        %v377 = vunpack.c.0.s8 %v376
        %v378 = vperm.slane %v370, %v377
        %v379 = vrot.slane %v374, 4
        %v380 = vsel %vm355, %v379, %v362
        %v381 = vrot.slane %v362, 4
        %v382 = vsel %vm355, %v374, %v381
        %v384 = vunpack.c.l.s4 1934713408
        %v385 = vunpack.c.0.s8 %v384
        %v386 = vperm.slane %v380, %v385
        %v388 = vunpack.c.l.s4 1934713408
        %v389 = vunpack.c.0.s8 %v388
        %v390 = vperm.slane %v382, %v389
        %v391 = vrot.slane %v378, 4
        %v392 = vsel %vm355, %v391, %v366
        %v393 = vrot.slane %v366, 4
        %v394 = vsel %vm355, %v378, %v393
        %v396 = vunpack.c.l.s4 1934713408
        %v397 = vunpack.c.0.s8 %v396
        %v398 = vperm.slane %v392, %v397
        %v400 = vunpack.c.l.s4 1934713408
        %v401 = vunpack.c.0.s8 %v400
        %v402 = vperm.slane %v394, %v401
        %v403 = vrot.slane %v386, 4
        %v404 = vsel %vm355, 0.0, %v403
        %v405 = vrot.slane %v390, 4
        %v406 = vsel %vm355, 0.0, %v405
        %v407 = vrot.slane %v398, 4
        %v408 = vsel %vm355, 0.0, %v407
        %v409 = vrot.slane %v402, 4
        %v410 = vsel %vm355, 0.0, %v409
        %v411 = vsel %vm355, %v405, %v386
        %v413 = vunpack.c.l.s4 1983009808
        %v414 = vunpack.c.0.s8 %v413
        %v415 = vperm.slane %v411, %v414
        %v416 = vrot.slane %v406, 4
        %v417 = vsel %vm355, %v416, %v404
        %v419 = vunpack.c.l.s4 1983009808
        %v420 = vunpack.c.0.s8 %v419
        %v421 = vperm.slane %v417, %v420
        %v422 = vsel %vm355, %v409, %v398
        %v424 = vunpack.c.l.s4 1983009808
        %v425 = vunpack.c.0.s8 %v424
        %v426 = vperm.slane %v422, %v425
        %v427 = vrot.slane %v410, 4
        %v428 = vsel %vm355, %v427, %v408
        %v430 = vunpack.c.l.s4 1983009808
        %v431 = vunpack.c.0.s8 %v430
        %v432 = vperm.slane %v428, %v431
        %v433 = vrot.slane %v421, 4
        %v434 = vsel %vm355, %v433, %v415
        %v435 = vrot.slane %v415, 4
        %v436 = vsel %vm355, %v421, %v435
        %v438 = vunpack.c.l.s4 1934713408
        %v439 = vunpack.c.0.s8 %v438
        %v440 = vperm.slane %v434, %v439
        %v442 = vunpack.c.l.s4 1934713408
        %v443 = vunpack.c.0.s8 %v442
        %v444 = vperm.slane %v436, %v443
        %v445 = vrot.slane %v432, 4
        %v446 = vsel %vm355, %v445, %v426
        %v447 = vrot.slane %v426, 4
        %v448 = vsel %vm355, %v432, %v447
        %v450 = vunpack.c.l.s4 1934713408
        %v451 = vunpack.c.0.s8 %v450
        %v452 = vperm.slane %v446, %v451
        %v454 = vunpack.c.l.s4 1934713408
        %v455 = vunpack.c.0.s8 %v454
        %v456 = vperm.slane %v448, %v455
        %v457 = vrot.slane %v452, 4
        %v458 = vsel %vm355, %v457, %v440
        %v459 = vrot.slane %v440, 4
        %v460 = vsel %vm355, %v452, %v459
        %v461 = vrot.slane %v456, 4
        %v462 = vsel %vm355, %v461, %v444
        %v463 = vrot.slane %v444, 4
        %v464 = vsel %vm355, %v456, %v463
        %465 = vrot.lane.b32.xlu0 %v342, 96
        %v466 = vpop.permute.xlu0 %465
        %467 = vrot.lane.b32.xlu0 %v346, 96
        %v468 = vpop.permute.xlu0 %467
        %469 = vrot.lane.b32.xlu0 %v349, 96
        %v470 = vpop.permute.xlu0 %469
        %471 = vrot.lane.b32.xlu0 %v352, 96
        %v472 = vpop.permute.xlu0 %471
        %v477 = vrot.slane %v470, 4
        %v478 = vsel %vm355, %v477, %v466
        %v479 = vrot.slane %v466, 4
        %v480 = vsel %vm355, %v470, %v479
        %v482 = vunpack.c.l.s4 1983009808
        %v483 = vunpack.c.0.s8 %v482
        %v484 = vperm.slane %v478, %v483
        %v486 = vunpack.c.l.s4 1983009808
        %v487 = vunpack.c.0.s8 %v486
        %v488 = vperm.slane %v480, %v487
        %v489 = vrot.slane %v472, 4
        %v490 = vsel %vm355, %v489, %v468
        %v491 = vrot.slane %v468, 4
        %v492 = vsel %vm355, %v472, %v491
        %v494 = vunpack.c.l.s4 1983009808
        %v495 = vunpack.c.0.s8 %v494
        %v496 = vperm.slane %v490, %v495
        %v498 = vunpack.c.l.s4 1983009808
        %v499 = vunpack.c.0.s8 %v498
        %v500 = vperm.slane %v492, %v499
        %v501 = vrot.slane %v496, 4
        %v502 = vsel %vm355, %v501, %v484
        %v503 = vrot.slane %v484, 4
        %v504 = vsel %vm355, %v496, %v503
        %v506 = vunpack.c.l.s4 1934713408
        %v507 = vunpack.c.0.s8 %v506
        %v508 = vperm.slane %v502, %v507
        %v510 = vunpack.c.l.s4 1934713408
        %v511 = vunpack.c.0.s8 %v510
        %v512 = vperm.slane %v504, %v511
        %v513 = vrot.slane %v500, 4
        %v514 = vsel %vm355, %v513, %v488
        %v515 = vrot.slane %v488, 4
        %v516 = vsel %vm355, %v500, %v515
        %v518 = vunpack.c.l.s4 1934713408
        %v519 = vunpack.c.0.s8 %v518
        %v520 = vperm.slane %v514, %v519
        %v522 = vunpack.c.l.s4 1934713408
        %v523 = vunpack.c.0.s8 %v522
        %v524 = vperm.slane %v516, %v523
        %v525 = vrot.slane %v508, 4
        %v526 = vsel %vm355, 0.0, %v525
        %v527 = vrot.slane %v512, 4
        %v528 = vsel %vm355, 0.0, %v527
        %v529 = vrot.slane %v520, 4
        %v530 = vsel %vm355, 0.0, %v529
        %v531 = vrot.slane %v524, 4
        %v532 = vsel %vm355, 0.0, %v531
        %v533 = vsel %vm355, %v527, %v508
        %v535 = vunpack.c.l.s4 1983009808
        %v536 = vunpack.c.0.s8 %v535
        %v537 = vperm.slane %v533, %v536
        %v538 = vrot.slane %v528, 4
        %v539 = vsel %vm355, %v538, %v526
        %v541 = vunpack.c.l.s4 1983009808
        %v542 = vunpack.c.0.s8 %v541
        %v543 = vperm.slane %v539, %v542
        %v544 = vsel %vm355, %v531, %v520
        %v546 = vunpack.c.l.s4 1983009808
        %v547 = vunpack.c.0.s8 %v546
        %v548 = vperm.slane %v544, %v547
        %v549 = vrot.slane %v532, 4
        %v550 = vsel %vm355, %v549, %v530
        %v552 = vunpack.c.l.s4 1983009808
        %v553 = vunpack.c.0.s8 %v552
        %v554 = vperm.slane %v550, %v553
        %v555 = vrot.slane %v543, 4
        %v556 = vsel %vm355, %v555, %v537
        %v557 = vrot.slane %v537, 4
        %v558 = vsel %vm355, %v543, %v557
        %v560 = vunpack.c.l.s4 1934713408
        %v561 = vunpack.c.0.s8 %v560
        %v562 = vperm.slane %v556, %v561
        %v564 = vunpack.c.l.s4 1934713408
        %v565 = vunpack.c.0.s8 %v564
        %v566 = vperm.slane %v558, %v565
        %v567 = vrot.slane %v554, 4
        %v568 = vsel %vm355, %v567, %v548
        %v569 = vrot.slane %v548, 4
        %v570 = vsel %vm355, %v554, %v569
        %v572 = vunpack.c.l.s4 1934713408
        %v573 = vunpack.c.0.s8 %v572
        %v574 = vperm.slane %v568, %v573
        %v576 = vunpack.c.l.s4 1934713408
        %v577 = vunpack.c.0.s8 %v576
        %v578 = vperm.slane %v570, %v577
        %v579 = vrot.slane %v574, 4
        %v580 = vsel %vm355, %v579, %v562
        %v581 = vrot.slane %v562, 4
        %v582 = vsel %vm355, %v574, %v581
        %v583 = vrot.slane %v578, 4
        %v584 = vsel %vm355, %v583, %v566
        %v585 = vrot.slane %v566, 4
        %v586 = vsel %vm355, %v578, %v585
        %587 = vrot.lane.b32.xlu0 %v342, 64
        %v588 = vpop.permute.xlu0 %587
        %589 = vrot.lane.b32.xlu0 %v346, 64
        %v590 = vpop.permute.xlu0 %589
        %591 = vrot.lane.b32.xlu0 %v349, 64
        %v592 = vpop.permute.xlu0 %591
        %593 = vrot.lane.b32.xlu0 %v352, 64
        %v594 = vpop.permute.xlu0 %593
        %v599 = vrot.slane %v592, 4
        %v600 = vsel %vm355, %v599, %v588
        %v601 = vrot.slane %v588, 4
        %v602 = vsel %vm355, %v592, %v601
        %v604 = vunpack.c.l.s4 1983009808
        %v605 = vunpack.c.0.s8 %v604
        %v606 = vperm.slane %v600, %v605
        %v608 = vunpack.c.l.s4 1983009808
        %v609 = vunpack.c.0.s8 %v608
        %v610 = vperm.slane %v602, %v609
        %v611 = vrot.slane %v594, 4
        %v612 = vsel %vm355, %v611, %v590
        %v613 = vrot.slane %v590, 4
        %v614 = vsel %vm355, %v594, %v613
        %v616 = vunpack.c.l.s4 1983009808
        %v617 = vunpack.c.0.s8 %v616
        %v618 = vperm.slane %v612, %v617
        %v620 = vunpack.c.l.s4 1983009808
        %v621 = vunpack.c.0.s8 %v620
        %v622 = vperm.slane %v614, %v621
        %v623 = vrot.slane %v618, 4
        %v624 = vsel %vm355, %v623, %v606
        %v625 = vrot.slane %v606, 4
        %v626 = vsel %vm355, %v618, %v625
        %v628 = vunpack.c.l.s4 1934713408
        %v629 = vunpack.c.0.s8 %v628
        %v630 = vperm.slane %v624, %v629
        %v632 = vunpack.c.l.s4 1934713408
        %v633 = vunpack.c.0.s8 %v632
        %v634 = vperm.slane %v626, %v633
        %v635 = vrot.slane %v622, 4
        %v636 = vsel %vm355, %v635, %v610
        %v637 = vrot.slane %v610, 4
        %v638 = vsel %vm355, %v622, %v637
        %v640 = vunpack.c.l.s4 1934713408
        %v641 = vunpack.c.0.s8 %v640
        %v642 = vperm.slane %v636, %v641
        %v644 = vunpack.c.l.s4 1934713408
        %v645 = vunpack.c.0.s8 %v644
        %v646 = vperm.slane %v638, %v645
        %v647 = vrot.slane %v630, 4
        %v648 = vsel %vm355, 0.0, %v647
        %v649 = vrot.slane %v634, 4
        %v650 = vsel %vm355, 0.0, %v649
        %v651 = vrot.slane %v642, 4
        %v652 = vsel %vm355, 0.0, %v651
        %v653 = vrot.slane %v646, 4
        %v654 = vsel %vm355, 0.0, %v653
        %v655 = vsel %vm355, %v649, %v630
        %v657 = vunpack.c.l.s4 1983009808
        %v658 = vunpack.c.0.s8 %v657
        %v659 = vperm.slane %v655, %v658
        %v660 = vrot.slane %v650, 4
        %v661 = vsel %vm355, %v660, %v648
        %v663 = vunpack.c.l.s4 1983009808
        %v664 = vunpack.c.0.s8 %v663
        %v665 = vperm.slane %v661, %v664
        %v666 = vsel %vm355, %v653, %v642
        %v668 = vunpack.c.l.s4 1983009808
        %v669 = vunpack.c.0.s8 %v668
        %v670 = vperm.slane %v666, %v669
        %v671 = vrot.slane %v654, 4
        %v672 = vsel %vm355, %v671, %v652
        %v674 = vunpack.c.l.s4 1983009808
        %v675 = vunpack.c.0.s8 %v674
        %v676 = vperm.slane %v672, %v675
        %v677 = vrot.slane %v665, 4
        %v678 = vsel %vm355, %v677, %v659
        %v679 = vrot.slane %v659, 4
        %v680 = vsel %vm355, %v665, %v679
        %v682 = vunpack.c.l.s4 1934713408
        %v683 = vunpack.c.0.s8 %v682
        %v684 = vperm.slane %v678, %v683
        %v686 = vunpack.c.l.s4 1934713408
        %v687 = vunpack.c.0.s8 %v686
        %v688 = vperm.slane %v680, %v687
        %v689 = vrot.slane %v676, 4
        %v690 = vsel %vm355, %v689, %v670
        %v691 = vrot.slane %v670, 4
        %v692 = vsel %vm355, %v676, %v691
        %v694 = vunpack.c.l.s4 1934713408
        %v695 = vunpack.c.0.s8 %v694
        %v696 = vperm.slane %v690, %v695
        %v698 = vunpack.c.l.s4 1934713408
        %v699 = vunpack.c.0.s8 %v698
        %v700 = vperm.slane %v692, %v699
        %v701 = vrot.slane %v696, 4
        %v702 = vsel %vm355, %v701, %v684
        %v703 = vrot.slane %v684, 4
        %v704 = vsel %vm355, %v696, %v703
        %v705 = vrot.slane %v700, 4
        %v706 = vsel %vm355, %v705, %v688
        %v707 = vrot.slane %v688, 4
        %v708 = vsel %vm355, %v700, %v707
        %vm709 = vcmask 64512
        %v711 = vsel %vm709, %v458, 0
        %v714 = vsel %vm709, %v580, 0
        %716 = vmatpush.xpose.msra.mxu0 0.0
        %717 = vmatpush.xpose.msra.mxu0 0.0
        %718 = vmatpush.xpose.msra.mxu0 0.0
        %719 = vmatpush.xpose.msra.mxu0 0.0
        %720 = vmatpush.xpose.msra.mxu0 0.0
        %721 = vmatpush.xpose.msra.mxu0 0.0
        %722 = vmatpush.xpose.msra.mxu0 0.0
        %723 = vmatpush.xpose.msra.mxu0 0.0
        %724 = vmatpush.xpose.msra.mxu0 0.0
        %725 = vmatpush.xpose.msra.mxu0 0.0
        %726 = vmatpush.xpose.msra.mxu0 0.0
        %727 = vmatpush.xpose.msra.mxu0 0.0
        %728 = vmatpush.xpose.msra.mxu0 0.0
        %729 = vmatpush.xpose.msra.mxu0 0.0
        %730 = vmatpush.xpose.msra.mxu0 0.0
        %731 = vmatpush.xpose.msra.mxu0 %v714
        %732 = vmatmul.f32.gmra.mxu0 %v711
        %v733 = vpop.f32.mrf.mxu0
        %v734 = vadd.f32 %v315, %v733
        %735 = vdwg.mxu0
        %v737 = vsel %vm709, %v460, 0
        %v740 = vsel %vm709, %v582, 0
        %742 = vmatpush.xpose.msra.mxu0 0.0
        %743 = vmatpush.xpose.msra.mxu0 0.0
        %744 = vmatpush.xpose.msra.mxu0 0.0
        %745 = vmatpush.xpose.msra.mxu0 0.0
        %746 = vmatpush.xpose.msra.mxu0 0.0
        %747 = vmatpush.xpose.msra.mxu0 0.0
        %748 = vmatpush.xpose.msra.mxu0 0.0
        %749 = vmatpush.xpose.msra.mxu0 0.0
        %750 = vmatpush.xpose.msra.mxu0 0.0
        %751 = vmatpush.xpose.msra.mxu0 0.0
        %752 = vmatpush.xpose.msra.mxu0 0.0
        %753 = vmatpush.xpose.msra.mxu0 0.0
        %754 = vmatpush.xpose.msra.mxu0 0.0
        %755 = vmatpush.xpose.msra.mxu0 0.0
        %756 = vmatpush.xpose.msra.mxu0 0.0
        %757 = vmatpush.xpose.msra.mxu0 %v740
        %758 = vmatmul.f32.gmra.mxu0 %v737
        %v759 = vpop.f32.mrf.mxu0
        %v760 = vadd.f32 %v315, %v759
        %761 = vdwg.mxu0
        %v763 = vsel %vm709, %v462, 0
        %v766 = vsel %vm709, %v584, 0
        %768 = vmatpush.xpose.msra.mxu0 0.0
        %769 = vmatpush.xpose.msra.mxu0 0.0
        %770 = vmatpush.xpose.msra.mxu0 0.0
        %771 = vmatpush.xpose.msra.mxu0 0.0
        %772 = vmatpush.xpose.msra.mxu0 0.0
        %773 = vmatpush.xpose.msra.mxu0 0.0
        %774 = vmatpush.xpose.msra.mxu0 0.0
        %775 = vmatpush.xpose.msra.mxu0 0.0
        %776 = vmatpush.xpose.msra.mxu0 0.0
        %777 = vmatpush.xpose.msra.mxu0 0.0
        %778 = vmatpush.xpose.msra.mxu0 0.0
        %779 = vmatpush.xpose.msra.mxu0 0.0
        %780 = vmatpush.xpose.msra.mxu0 0.0
        %781 = vmatpush.xpose.msra.mxu0 0.0
        %782 = vmatpush.xpose.msra.mxu0 0.0
        %783 = vmatpush.xpose.msra.mxu0 %v766
        %784 = vmatmul.f32.gmra.mxu0 %v763
        %v785 = vpop.f32.mrf.mxu0
        %v786 = vadd.f32 %v315, %v785
        %787 = vdwg.mxu0
        %v789 = vsel %vm709, %v464, 0
        %v792 = vsel %vm709, %v586, 0
        %794 = vmatpush.xpose.msra.mxu0 0.0
        %795 = vmatpush.xpose.msra.mxu0 0.0
        %796 = vmatpush.xpose.msra.mxu0 0.0
        %797 = vmatpush.xpose.msra.mxu0 0.0
        %798 = vmatpush.xpose.msra.mxu0 0.0
        %799 = vmatpush.xpose.msra.mxu0 0.0
        %800 = vmatpush.xpose.msra.mxu0 0.0
        %801 = vmatpush.xpose.msra.mxu0 0.0
        %802 = vmatpush.xpose.msra.mxu0 0.0
        %803 = vmatpush.xpose.msra.mxu0 0.0
        %804 = vmatpush.xpose.msra.mxu0 0.0
        %805 = vmatpush.xpose.msra.mxu0 0.0
        %806 = vmatpush.xpose.msra.mxu0 0.0
        %807 = vmatpush.xpose.msra.mxu0 0.0
        %808 = vmatpush.xpose.msra.mxu0 0.0
        %809 = vmatpush.xpose.msra.mxu0 %v792
        %810 = vmatmul.f32.gmra.mxu0 %v789
        %v811 = vpop.f32.mrf.mxu0
        %v812 = vadd.f32 %v315, %v811
        %813 = vdwg.mxu0
        %v814 = vsel %vm709, %v734, -inf
        %815 = vmax.xlane.f32.xlu0 %v814
        %v816 = vpop.xlane.xlu0 %815
        %v817 = vsel %vm709, %v760, -inf
        %818 = vmax.xlane.f32.xlu0 %v817
        %v819 = vpop.xlane.xlu0 %818
        %v820 = vsel %vm709, %v786, -inf
        %821 = vmax.xlane.f32.xlu0 %v820
        %v822 = vpop.xlane.xlu0 %821
        %v823 = vsel %vm709, %v812, -inf
        %824 = vmax.xlane.f32.xlu0 %v823
        %v825 = vpop.xlane.xlu0 %824
        %v826 = vsub.f32 %v734, %v816
        %v827 = vsub.f32 %v760, %v819
        %v828 = vsub.f32 %v786, %v822
        %v829 = vsub.f32 %v812, %v825
        %v830 = vmul.f32 %v826, 1.442695
        %v831 = vpow.pop %v830
        %v832 = vmul.f32 %v827, 1.442695
        %v833 = vpow.pop %v832
        %v834 = vmul.f32 %v828, 1.442695
        %v835 = vpow.pop %v834
        %v836 = vmul.f32 %v829, 1.442695
        %v837 = vpow.pop %v836
        %v838 = vsel %vm709, %v831, 0.0
        %839 = vadd.xlane.f32.xlu0 %v838
        %v840 = vpop.xlane.xlu0 %839
        %v841 = vsel %vm709, %v833, 0.0
        %842 = vadd.xlane.f32.xlu0 %v841
        %v843 = vpop.xlane.xlu0 %842
        %v844 = vsel %vm709, %v835, 0.0
        %845 = vadd.xlane.f32.xlu0 %v844
        %v846 = vpop.xlane.xlu0 %845
        %v847 = vsel %vm709, %v837, 0.0
        %848 = vadd.xlane.f32.xlu0 %v847
        %v849 = vpop.xlane.xlu0 %848
        %v850 = vrcp.pop %v840
        %v851 = vmul.f32 %v840, %v850
        %v852 = vsub.f32 1.0, %v851
        %v853 = vmul.f32 %v850, %v852
        %v854 = vadd.f32 %v850, %v853
        %vm855 = vweird.f32 %v840
        %vm856 = vweird.f32 %v850
        %vm857 = vmor %vm855, %vm856
        %v858 = vsel %vm857, %v850, %v854
        %v859 = vand.u32 2147483647, %v840
        %vm860 = vcmp.eq.f32.partialorder %v859, 8.507059e+37
        %v861 = vand.u32 %v840, 2147483648
        %v862 = vor.u32 1.1754944e-38, %v861
        %v863 = vsel %vm860, %v862, %v858
        %v864 = vmul.f32 %v831, %v863
        %v865 = vrcp.pop %v843
        %v866 = vmul.f32 %v843, %v865
        %v867 = vsub.f32 1.0, %v866
        %v868 = vmul.f32 %v865, %v867
        %v869 = vadd.f32 %v865, %v868
        %vm870 = vweird.f32 %v843
        %vm871 = vweird.f32 %v865
        %vm872 = vmor %vm870, %vm871
        %v873 = vsel %vm872, %v865, %v869
        %v874 = vand.u32 2147483647, %v843
        %vm875 = vcmp.eq.f32.partialorder %v874, 8.507059e+37
        %v876 = vand.u32 %v843, 2147483648
        %v877 = vor.u32 1.1754944e-38, %v876
        %v878 = vsel %vm875, %v877, %v873
        %v879 = vmul.f32 %v833, %v878
        %v880 = vrcp.pop %v846
        %v881 = vmul.f32 %v846, %v880
        %v882 = vsub.f32 1.0, %v881
        %v883 = vmul.f32 %v880, %v882
        %v884 = vadd.f32 %v880, %v883
        %vm885 = vweird.f32 %v846
        %vm886 = vweird.f32 %v880
        %vm887 = vmor %vm885, %vm886
        %v888 = vsel %vm887, %v880, %v884
        %v889 = vand.u32 2147483647, %v846
        %vm890 = vcmp.eq.f32.partialorder %v889, 8.507059e+37
        %v891 = vand.u32 %v846, 2147483648
        %v892 = vor.u32 1.1754944e-38, %v891
        %v893 = vsel %vm890, %v892, %v888
        %v894 = vmul.f32 %v835, %v893
        %v895 = vrcp.pop %v849
        %v896 = vmul.f32 %v849, %v895
        %v897 = vsub.f32 1.0, %v896
        %v898 = vmul.f32 %v895, %v897
        %v899 = vadd.f32 %v895, %v898
        %vm900 = vweird.f32 %v849
        %vm901 = vweird.f32 %v895
        %vm902 = vmor %vm900, %vm901
        %v903 = vsel %vm902, %v895, %v899
        %v904 = vand.u32 2147483647, %v849
        %vm905 = vcmp.eq.f32.partialorder %v904, 8.507059e+37
        %v906 = vand.u32 %v849, 2147483648
        %v907 = vor.u32 1.1754944e-38, %v906
        %v908 = vsel %vm905, %v907, %v903
        %v909 = vmul.f32 %v837, %v908
        %v911 = vsel %vm709, %v864, 0
        %913 = vmatpush.msra.mxu0 0.0
        %914 = vmatpush.msra.mxu0 0.0
        %915 = vmatpush.msra.mxu0 0.0
        %916 = vmatpush.msra.mxu0 0.0
        %917 = vmatpush.msra.mxu0 0.0
        %918 = vmatpush.msra.mxu0 0.0
        %919 = vmatpush.msra.mxu0 0.0
        %920 = vmatpush.msra.mxu0 0.0
        %921 = vmatpush.msra.mxu0 0.0
        %922 = vmatpush.msra.mxu0 0.0
        %923 = vmatpush.msra.mxu0 0.0
        %924 = vmatpush.msra.mxu0 0.0
        %925 = vmatpush.msra.mxu0 0.0
        %926 = vmatpush.msra.mxu0 0.0
        %927 = vmatpush.msra.mxu0 0.0
        %928 = vmatpush.msra.mxu0 %v702
        %929 = vmatmul.f32.gmra.mxu0 %v911
        %v930 = vpop.f32.mrf.mxu0
        %v931 = vadd.f32 0.0, %v930
        %932 = vdwg.mxu0
        %v934 = vsel %vm709, %v879, 0
        %936 = vmatpush.msra.mxu0 0.0
        %937 = vmatpush.msra.mxu0 0.0
        %938 = vmatpush.msra.mxu0 0.0
        %939 = vmatpush.msra.mxu0 0.0
        %940 = vmatpush.msra.mxu0 0.0
        %941 = vmatpush.msra.mxu0 0.0
        %942 = vmatpush.msra.mxu0 0.0
        %943 = vmatpush.msra.mxu0 0.0
        %944 = vmatpush.msra.mxu0 0.0
        %945 = vmatpush.msra.mxu0 0.0
        %946 = vmatpush.msra.mxu0 0.0
        %947 = vmatpush.msra.mxu0 0.0
        %948 = vmatpush.msra.mxu0 0.0
        %949 = vmatpush.msra.mxu0 0.0
        %950 = vmatpush.msra.mxu0 0.0
        %951 = vmatpush.msra.mxu0 %v704
        %952 = vmatmul.f32.gmra.mxu0 %v934
        %v953 = vpop.f32.mrf.mxu0
        %v954 = vadd.f32 0.0, %v953
        %955 = vdwg.mxu0
        %v957 = vsel %vm709, %v894, 0
        %959 = vmatpush.msra.mxu0 0.0
        %960 = vmatpush.msra.mxu0 0.0
        %961 = vmatpush.msra.mxu0 0.0
        %962 = vmatpush.msra.mxu0 0.0
        %963 = vmatpush.msra.mxu0 0.0
        %964 = vmatpush.msra.mxu0 0.0
        %965 = vmatpush.msra.mxu0 0.0
        %966 = vmatpush.msra.mxu0 0.0
        %967 = vmatpush.msra.mxu0 0.0
        %968 = vmatpush.msra.mxu0 0.0
        %969 = vmatpush.msra.mxu0 0.0
        %970 = vmatpush.msra.mxu0 0.0
        %971 = vmatpush.msra.mxu0 0.0
        %972 = vmatpush.msra.mxu0 0.0
        %973 = vmatpush.msra.mxu0 0.0
        %974 = vmatpush.msra.mxu0 %v706
        %975 = vmatmul.f32.gmra.mxu0 %v957
        %v976 = vpop.f32.mrf.mxu0
        %v977 = vadd.f32 0.0, %v976
        %978 = vdwg.mxu0
        %v980 = vsel %vm709, %v909, 0
        %982 = vmatpush.msra.mxu0 0.0
        %983 = vmatpush.msra.mxu0 0.0
        %984 = vmatpush.msra.mxu0 0.0
        %985 = vmatpush.msra.mxu0 0.0
        %986 = vmatpush.msra.mxu0 0.0
        %987 = vmatpush.msra.mxu0 0.0
        %988 = vmatpush.msra.mxu0 0.0
        %989 = vmatpush.msra.mxu0 0.0
        %990 = vmatpush.msra.mxu0 0.0
        %991 = vmatpush.msra.mxu0 0.0
        %992 = vmatpush.msra.mxu0 0.0
        %993 = vmatpush.msra.mxu0 0.0
        %994 = vmatpush.msra.mxu0 0.0
        %995 = vmatpush.msra.mxu0 0.0
        %996 = vmatpush.msra.mxu0 0.0
        %997 = vmatpush.msra.mxu0 %v708
        %998 = vmatmul.f32.gmra.mxu0 %v980
        %v999 = vpop.f32.mrf.mxu0
        %v1000 = vadd.f32 0.0, %v999
        %1001 = vdwg.mxu0
        %v1002 = vrot.slane %v977, 4
        %v1003 = vsel %vm355, %v1002, %v931
        %v1004 = vrot.slane %v931, 4
        %v1005 = vsel %vm355, %v977, %v1004
        %v1007 = vunpack.c.l.s4 1983009808
        %v1008 = vunpack.c.0.s8 %v1007
        %v1009 = vperm.slane %v1003, %v1008
        %v1011 = vunpack.c.l.s4 1983009808
        %v1012 = vunpack.c.0.s8 %v1011
        %v1013 = vperm.slane %v1005, %v1012
        %v1014 = vrot.slane %v1000, 4
        %v1015 = vsel %vm355, %v1014, %v954
        %v1016 = vrot.slane %v954, 4
        %v1017 = vsel %vm355, %v1000, %v1016
        %v1019 = vunpack.c.l.s4 1983009808
        %v1020 = vunpack.c.0.s8 %v1019
        %v1021 = vperm.slane %v1015, %v1020
        %v1023 = vunpack.c.l.s4 1983009808
        %v1024 = vunpack.c.0.s8 %v1023
        %v1025 = vperm.slane %v1017, %v1024
        %v1026 = vrot.slane %v1021, 4
        %v1027 = vsel %vm355, %v1026, %v1009
        %v1028 = vrot.slane %v1009, 4
        %v1029 = vsel %vm355, %v1021, %v1028
        %v1031 = vunpack.c.l.s4 1934713408
        %v1032 = vunpack.c.0.s8 %v1031
        %v1033 = vperm.slane %v1027, %v1032
        %v1035 = vunpack.c.l.s4 1934713408
        %v1036 = vunpack.c.0.s8 %v1035
        %v1037 = vperm.slane %v1029, %v1036
        %v1038 = vrot.slane %v1025, 4
        %v1039 = vsel %vm355, %v1038, %v1013
        %v1040 = vrot.slane %v1013, 4
        %v1041 = vsel %vm355, %v1025, %v1040
        %v1043 = vunpack.c.l.s4 1934713408
        %v1044 = vunpack.c.0.s8 %v1043
        %v1045 = vperm.slane %v1039, %v1044
        %v1047 = vunpack.c.l.s4 1934713408
        %v1048 = vunpack.c.0.s8 %v1047
        %v1049 = vperm.slane %v1041, %v1048
        %v1050 = vrot.slane %v1033, 4
        %v1051 = vsel %vm355, 0.0, %v1050
        %v1052 = vrot.slane %v1037, 4
        %v1053 = vsel %vm355, 0.0, %v1052
        %v1054 = vrot.slane %v1045, 4
        %v1055 = vsel %vm355, 0.0, %v1054
        %v1056 = vrot.slane %v1049, 4
        %v1057 = vsel %vm355, 0.0, %v1056
        %v1058 = vsel %vm355, %v1052, %v1033
        %v1060 = vunpack.c.l.s4 1983009808
        %v1061 = vunpack.c.0.s8 %v1060
        %v1062 = vperm.slane %v1058, %v1061
        %v1063 = vrot.slane %v1053, 4
        %v1064 = vsel %vm355, %v1063, %v1051
        %v1066 = vunpack.c.l.s4 1983009808
        %v1067 = vunpack.c.0.s8 %v1066
        %v1068 = vperm.slane %v1064, %v1067
        %v1069 = vsel %vm355, %v1056, %v1045
        %v1071 = vunpack.c.l.s4 1983009808
        %v1072 = vunpack.c.0.s8 %v1071
        %v1073 = vperm.slane %v1069, %v1072
        %v1074 = vrot.slane %v1057, 4
        %v1075 = vsel %vm355, %v1074, %v1055
        %v1077 = vunpack.c.l.s4 1983009808
        %v1078 = vunpack.c.0.s8 %v1077
        %v1079 = vperm.slane %v1075, %v1078
        %v1080 = vrot.slane %v1068, 4
        %v1081 = vsel %vm355, %v1080, %v1062
        %v1082 = vrot.slane %v1062, 4
        %v1083 = vsel %vm355, %v1068, %v1082
        %v1085 = vunpack.c.l.s4 1934713408
        %v1086 = vunpack.c.0.s8 %v1085
        %v1087 = vperm.slane %v1081, %v1086
        %v1089 = vunpack.c.l.s4 1934713408
        %v1090 = vunpack.c.0.s8 %v1089
        %v1091 = vperm.slane %v1083, %v1090
        %v1092 = vrot.slane %v1079, 4
        %v1093 = vsel %vm355, %v1092, %v1073
        %v1094 = vrot.slane %v1073, 4
        %v1095 = vsel %vm355, %v1079, %v1094
        %v1097 = vunpack.c.l.s4 1934713408
        %v1098 = vunpack.c.0.s8 %v1097
        %v1099 = vperm.slane %v1093, %v1098
        %v1101 = vunpack.c.l.s4 1934713408
        %v1102 = vunpack.c.0.s8 %v1101
        %v1103 = vperm.slane %v1095, %v1102
        %v1104 = vrot.slane %v1099, 4
        %v1105 = vsel %vm355, %v1104, %v1087
        %v1106 = vrot.slane %v1087, 4
        %v1107 = vsel %vm355, %v1099, %v1106
        %v1108 = vrot.slane %v1103, 4
        %v1109 = vsel %vm355, %v1108, %v1091
        %v1110 = vrot.slane %v1091, 4
        %v1111 = vsel %vm355, %v1103, %v1110
        %1113 = vrot.lane.b32.xlu0 %v1107, 8
        %v1114 = vpop.permute.xlu0 %1113
        %1117 = vrot.lane.b32.xlu0 %v1109, 16
        %v1118 = vpop.permute.xlu0 %1117
        %1121 = vrot.lane.b32.xlu0 %v1111, 24
        %v1122 = vpop.permute.xlu0 %1121
        %v1124 = vsel %vm709, %v1105, %v1114
        %vm1125 = vcmask 130048
        %v1126 = vsel %vm1125, %v1124, %v1118
        %vm1127 = vcmask 195584
        %v1128 = vsel %vm1127, %v1126, %v1122
        %1133 = vrot.lane.b32.xlu0 %v291, 32
        %v1134 = vpop.permute.xlu0 %1133
        %1135 = vrot.lane.b32.xlu0 %v292, 32
        %v1136 = vpop.permute.xlu0 %1135
        %1137 = vrot.lane.b32.xlu0 %v293, 32
        %v1138 = vpop.permute.xlu0 %1137
        %1139 = vrot.lane.b32.xlu0 %v294, 32
        %v1140 = vpop.permute.xlu0 %1139
        %1146 = vrot.lane.b32.xlu0 %v319, 32
        %v1147 = vpop.permute.xlu0 %1146
        %v1150 = vsel %vm320, %v1128, 0
        %1152 = vmatpush.msra.mxu0 0.0
        %1153 = vmatpush.msra.mxu0 0.0
        %1154 = vmatpush.msra.mxu0 0.0
        %1155 = vmatpush.msra.mxu0 0.0
        %1156 = vmatpush.msra.mxu0 0.0
        %1157 = vmatpush.msra.mxu0 0.0
        %1158 = vmatpush.msra.mxu0 0.0
        %1159 = vmatpush.msra.mxu0 0.0
        %1160 = vmatpush.msra.mxu0 0.0
        %1161 = vmatpush.msra.mxu0 0.0
        %1162 = vmatpush.msra.mxu0 0.0
        %1163 = vmatpush.msra.mxu0 0.0
        %1164 = vmatpush.msra.mxu0 %v1140
        %1165 = vmatpush.msra.mxu0 %v1138
        %1166 = vmatpush.msra.mxu0 %v1136
        %1167 = vmatpush.msra.mxu0 %v1134
        %1168 = vmatmul.f32.gmra.mxu0 %v1150
        %v1169 = vpop.f32.mrf.mxu0
        %v1170 = vadd.f32 %v1147, %v1169
        %1171 = vdwg.mxu0
        %v1172 = vadd.f32 %v288, %v1170
        %v1173 = vsel %vm320, %v1172, 0.0
        %1174 = vadd.xlane.f32.xlu0 %v1173
        %v1175 = vpop.xlane.xlu0 %1174
        %v1176 = vrcp.pop 32.0
        %v1177 = vmul.f32 32.0, %v1176
        %v1178 = vsub.f32 1.0, %v1177
        %v1179 = vmul.f32 %v1176, %v1178
        %v1180 = vadd.f32 %v1176, %v1179
        %vm1181 = vweird.f32 %v1176
        %v1182 = vsel %vm1181, %v1176, %v1180
        %v1183 = vmul.f32 %v1175, %v1182
        %v1184 = vsub.f32 %v1172, %v1183
        %v1185 = vmul.f32 %v1184, %v1184
        %v1186 = vsel %vm320, %v1185, 0.0
        %1187 = vadd.xlane.f32.xlu0 %v1186
        %v1188 = vpop.xlane.xlu0 %1187
        %v1189 = vmul.f32 %v1188, %v1182
        %v1190 = vadd.f32 %v1189, 1e-05
        %v1191 = vrsqrt.pop %v1190
        %v1192 = vmul.f32 %v1191, %v1190
        %v1193 = vmul.f32 %v1192, %v1191
        %v1194 = vmul.f32 0.5, %v1193
        %v1195 = vsub.f32 1.5, %v1194
        %v1196 = vmul.f32 %v1191, %v1195
        %vm1197 = vweird.f32 %v1190
        %vm1198 = vweird.f32 %v1191
        %vm1199 = vmor %vm1197, %vm1198
        %v1200 = vsel %vm1199, %v1191, %v1196
        %v1201 = vmul.f32 %v1184, %v1200
        %v1202 = vperm.slane %v311, 4
        %v1203 = vmul.f32 %v1201, %v1202
        %v1204 = vperm.slane %v311, 5
        %v1205 = vadd.f32 %v1203, %v1204
        %v1206 = vperm.slane %v311, 1
        %v1208 = vsel %vm320, %v1205, 0
        %1210 = vmatpush.msra.mxu0 0.0
        %1211 = vmatpush.msra.mxu0 0.0
        %1212 = vmatpush.msra.mxu0 0.0
        %1213 = vmatpush.msra.mxu0 0.0
        %1214 = vmatpush.msra.mxu0 0.0
        %1215 = vmatpush.msra.mxu0 0.0
        %1216 = vmatpush.msra.mxu0 0.0
        %1217 = vmatpush.msra.mxu0 0.0
        %1218 = vmatpush.msra.mxu0 0.0
        %1219 = vmatpush.msra.mxu0 0.0
        %1220 = vmatpush.msra.mxu0 0.0
        %1221 = vmatpush.msra.mxu0 0.0
        %1222 = vmatpush.msra.mxu0 %v298
        %1223 = vmatpush.msra.mxu0 %v297
        %1224 = vmatpush.msra.mxu0 %v296
        %1225 = vmatpush.msra.mxu0 %v295
        %1226 = vmatmul.f32.gmra.mxu0 %v1208
        %v1227 = vpop.f32.mrf.mxu0
        %v1228 = vadd.f32 %v1206, %v1227
        %1229 = vdwg.mxu0
        %1234 = vrot.lane.b32.xlu0 %v295, 96
        %v1235 = vpop.permute.xlu0 %1234
        %1236 = vrot.lane.b32.xlu0 %v296, 96
        %v1237 = vpop.permute.xlu0 %1236
        %1238 = vrot.lane.b32.xlu0 %v297, 96
        %v1239 = vpop.permute.xlu0 %1238
        %1240 = vrot.lane.b32.xlu0 %v298, 96
        %v1241 = vpop.permute.xlu0 %1240
        %1247 = vrot.lane.b32.xlu0 %v1206, 96
        %v1248 = vpop.permute.xlu0 %1247
        %v1251 = vsel %vm320, %v289, 0
        %v1254 = vsel %vm320, %v290, 0
        %1256 = vmatpush.msra.mxu0 0.0
        %1257 = vmatpush.msra.mxu0 0.0
        %1258 = vmatpush.msra.mxu0 0.0
        %1259 = vmatpush.msra.mxu0 0.0
        %1260 = vmatpush.msra.mxu0 0.0
        %1261 = vmatpush.msra.mxu0 0.0
        %1262 = vmatpush.msra.mxu0 0.0
        %1263 = vmatpush.msra.mxu0 0.0
        %1264 = vmatpush.msra.mxu0 0.0
        %1265 = vmatpush.msra.mxu0 0.0
        %1266 = vmatpush.msra.mxu0 0.0
        %1267 = vmatpush.msra.mxu0 0.0
        %1268 = vmatpush.msra.mxu0 %v1241
        %1269 = vmatpush.msra.mxu0 %v1239
        %1270 = vmatpush.msra.mxu0 %v1237
        %1271 = vmatpush.msra.mxu0 %v1235
        %1272 = vmatmul.f32.gmra.mxu0 %v1251
        %v1273 = vpop.f32.mrf.mxu0
        %v1274 = vadd.f32 %v1248, %v1273
        %1275 = vmatmul.f32.gmra.mxu0 %v1254
        %v1276 = vpop.f32.mrf.mxu0
        %v1277 = vadd.f32 %v1248, %v1276
        %1278 = vdwg.mxu0
        %1280 = vrot.lane.b32.xlu0 %v1228, 120
        %v1281 = vpop.permute.xlu0 %1280
        %1283 = vrot.lane.b32.xlu0 %v1228, 112
        %v1284 = vpop.permute.xlu0 %1283
        %1286 = vrot.lane.b32.xlu0 %v1228, 104
        %v1287 = vpop.permute.xlu0 %1286
        %v1289 = vrot.slane %v1284, 4
        %v1290 = vsel %vm355, %v1289, %v1228
        %v1291 = vrot.slane %v1228, 4
        %v1292 = vsel %vm355, %v1284, %v1291
        %v1294 = vunpack.c.l.s4 1983009808
        %v1295 = vunpack.c.0.s8 %v1294
        %v1296 = vperm.slane %v1290, %v1295
        %v1298 = vunpack.c.l.s4 1983009808
        %v1299 = vunpack.c.0.s8 %v1298
        %v1300 = vperm.slane %v1292, %v1299
        %v1301 = vrot.slane %v1287, 4
        %v1302 = vsel %vm355, %v1301, %v1281
        %v1303 = vrot.slane %v1281, 4
        %v1304 = vsel %vm355, %v1287, %v1303
        %v1306 = vunpack.c.l.s4 1983009808
        %v1307 = vunpack.c.0.s8 %v1306
        %v1308 = vperm.slane %v1302, %v1307
        %v1310 = vunpack.c.l.s4 1983009808
        %v1311 = vunpack.c.0.s8 %v1310
        %v1312 = vperm.slane %v1304, %v1311
        %v1313 = vrot.slane %v1308, 4
        %v1314 = vsel %vm355, %v1313, %v1296
        %v1315 = vrot.slane %v1296, 4
        %v1316 = vsel %vm355, %v1308, %v1315
        %v1318 = vunpack.c.l.s4 1934713408
        %v1319 = vunpack.c.0.s8 %v1318
        %v1320 = vperm.slane %v1314, %v1319
        %v1322 = vunpack.c.l.s4 1934713408
        %v1323 = vunpack.c.0.s8 %v1322
        %v1324 = vperm.slane %v1316, %v1323
        %v1325 = vrot.slane %v1312, 4
        %v1326 = vsel %vm355, %v1325, %v1300
        %v1327 = vrot.slane %v1300, 4
        %v1328 = vsel %vm355, %v1312, %v1327
        %v1330 = vunpack.c.l.s4 1934713408
        %v1331 = vunpack.c.0.s8 %v1330
        %v1332 = vperm.slane %v1326, %v1331
        %v1334 = vunpack.c.l.s4 1934713408
        %v1335 = vunpack.c.0.s8 %v1334
        %v1336 = vperm.slane %v1328, %v1335
        %v1337 = vrot.slane %v1320, 4
        %v1338 = vsel %vm355, 0.0, %v1337
        %v1339 = vrot.slane %v1324, 4
        %v1340 = vsel %vm355, 0.0, %v1339
        %v1341 = vrot.slane %v1332, 4
        %v1342 = vsel %vm355, 0.0, %v1341
        %v1343 = vrot.slane %v1336, 4
        %v1344 = vsel %vm355, 0.0, %v1343
        %v1345 = vsel %vm355, %v1339, %v1320
        %v1347 = vunpack.c.l.s4 1983009808
        %v1348 = vunpack.c.0.s8 %v1347
        %v1349 = vperm.slane %v1345, %v1348
        %v1350 = vrot.slane %v1340, 4
        %v1351 = vsel %vm355, %v1350, %v1338
        %v1353 = vunpack.c.l.s4 1983009808
        %v1354 = vunpack.c.0.s8 %v1353
        %v1355 = vperm.slane %v1351, %v1354
        %v1356 = vsel %vm355, %v1343, %v1332
        %v1358 = vunpack.c.l.s4 1983009808
        %v1359 = vunpack.c.0.s8 %v1358
        %v1360 = vperm.slane %v1356, %v1359
        %v1361 = vrot.slane %v1344, 4
        %v1362 = vsel %vm355, %v1361, %v1342
        %v1364 = vunpack.c.l.s4 1983009808
        %v1365 = vunpack.c.0.s8 %v1364
        %v1366 = vperm.slane %v1362, %v1365
        %v1367 = vrot.slane %v1355, 4
        %v1368 = vsel %vm355, %v1367, %v1349
        %v1369 = vrot.slane %v1349, 4
        %v1370 = vsel %vm355, %v1355, %v1369
        %v1372 = vunpack.c.l.s4 1934713408
        %v1373 = vunpack.c.0.s8 %v1372
        %v1374 = vperm.slane %v1368, %v1373
        %v1376 = vunpack.c.l.s4 1934713408
        %v1377 = vunpack.c.0.s8 %v1376
        %v1378 = vperm.slane %v1370, %v1377
        %v1379 = vrot.slane %v1366, 4
        %v1380 = vsel %vm355, %v1379, %v1360
        %v1381 = vrot.slane %v1360, 4
        %v1382 = vsel %vm355, %v1366, %v1381
        %v1384 = vunpack.c.l.s4 1934713408
        %v1385 = vunpack.c.0.s8 %v1384
        %v1386 = vperm.slane %v1380, %v1385
        %v1388 = vunpack.c.l.s4 1934713408
        %v1389 = vunpack.c.0.s8 %v1388
        %v1390 = vperm.slane %v1382, %v1389
        %v1391 = vrot.slane %v1386, 4
        %v1392 = vsel %vm355, %v1391, %v1374
        %v1393 = vrot.slane %v1374, 4
        %v1394 = vsel %vm355, %v1386, %v1393
        %v1395 = vrot.slane %v1390, 4
        %v1396 = vsel %vm355, %v1395, %v1378
        %v1397 = vrot.slane %v1378, 4
        %v1398 = vsel %vm355, %v1390, %v1397
        %1401 = vrot.lane.b32.xlu0 %v1274, 120
        %v1402 = vpop.permute.xlu0 %1401
        %1403 = vrot.lane.b32.xlu0 %v1277, 120
        %v1404 = vpop.permute.xlu0 %1403
        %1407 = vrot.lane.b32.xlu0 %v1274, 112
        %v1408 = vpop.permute.xlu0 %1407
        %1409 = vrot.lane.b32.xlu0 %v1277, 112
        %v1410 = vpop.permute.xlu0 %1409
        %1413 = vrot.lane.b32.xlu0 %v1274, 104
        %v1414 = vpop.permute.xlu0 %1413
        %1415 = vrot.lane.b32.xlu0 %v1277, 104
        %v1416 = vpop.permute.xlu0 %1415
        %v1419 = vrot.slane %v1408, 4
        %v1420 = vsel %vm355, %v1419, %v1274
        %v1421 = vrot.slane %v1274, 4
        %v1422 = vsel %vm355, %v1408, %v1421
        %v1424 = vunpack.c.l.s4 1983009808
        %v1425 = vunpack.c.0.s8 %v1424
        %v1426 = vperm.slane %v1420, %v1425
        %v1428 = vunpack.c.l.s4 1983009808
        %v1429 = vunpack.c.0.s8 %v1428
        %v1430 = vperm.slane %v1422, %v1429
        %v1431 = vrot.slane %v1414, 4
        %v1432 = vsel %vm355, %v1431, %v1402
        %v1433 = vrot.slane %v1402, 4
        %v1434 = vsel %vm355, %v1414, %v1433
        %v1436 = vunpack.c.l.s4 1983009808
        %v1437 = vunpack.c.0.s8 %v1436
        %v1438 = vperm.slane %v1432, %v1437
        %v1440 = vunpack.c.l.s4 1983009808
        %v1441 = vunpack.c.0.s8 %v1440
        %v1442 = vperm.slane %v1434, %v1441
        %v1443 = vrot.slane %v1438, 4
        %v1444 = vsel %vm355, %v1443, %v1426
        %v1445 = vrot.slane %v1426, 4
        %v1446 = vsel %vm355, %v1438, %v1445
        %v1448 = vunpack.c.l.s4 1934713408
        %v1449 = vunpack.c.0.s8 %v1448
        %v1450 = vperm.slane %v1444, %v1449
        %v1452 = vunpack.c.l.s4 1934713408
        %v1453 = vunpack.c.0.s8 %v1452
        %v1454 = vperm.slane %v1446, %v1453
        %v1455 = vrot.slane %v1442, 4
        %v1456 = vsel %vm355, %v1455, %v1430
        %v1457 = vrot.slane %v1430, 4
        %v1458 = vsel %vm355, %v1442, %v1457
        %v1460 = vunpack.c.l.s4 1934713408
        %v1461 = vunpack.c.0.s8 %v1460
        %v1462 = vperm.slane %v1456, %v1461
        %v1464 = vunpack.c.l.s4 1934713408
        %v1465 = vunpack.c.0.s8 %v1464
        %v1466 = vperm.slane %v1458, %v1465
        %v1467 = vrot.slane %v1450, 4
        %v1468 = vsel %vm355, 0.0, %v1467
        %v1469 = vrot.slane %v1454, 4
        %v1470 = vsel %vm355, 0.0, %v1469
        %v1471 = vrot.slane %v1462, 4
        %v1472 = vsel %vm355, 0.0, %v1471
        %v1473 = vrot.slane %v1466, 4
        %v1474 = vsel %vm355, 0.0, %v1473
        %v1475 = vrot.slane %v1410, 4
        %v1476 = vsel %vm355, %v1475, %v1277
        %v1478 = vunpack.c.l.s4 1983009808
        %v1479 = vunpack.c.0.s8 %v1478
        %v1480 = vperm.slane %v1476, %v1479
        %v1481 = vrot.slane %v1416, 4
        %v1482 = vsel %vm355, %v1481, %v1404
        %v1484 = vunpack.c.l.s4 1983009808
        %v1485 = vunpack.c.0.s8 %v1484
        %v1486 = vperm.slane %v1482, %v1485
        %v1487 = vrot.slane %v1486, 4
        %v1488 = vsel %vm355, %v1487, %v1480
        %v1489 = vrot.slane %v1480, 4
        %v1490 = vsel %vm355, %v1486, %v1489
        %v1492 = vunpack.c.l.s4 1934713408
        %v1493 = vunpack.c.0.s8 %v1492
        %v1494 = vperm.slane %v1488, %v1493
        %v1496 = vunpack.c.l.s4 1934713408
        %v1497 = vunpack.c.0.s8 %v1496
        %v1498 = vperm.slane %v1490, %v1497
        %v1499 = vrot.slane %v1494, 4
        %v1500 = vsel %vm355, 0.0, %v1499
        %v1501 = vrot.slane %v1498, 4
        %v1502 = vsel %vm355, 0.0, %v1501
        %v1503 = vsel %vm355, %v1469, %v1450
        %v1505 = vunpack.c.l.s4 1983009808
        %v1506 = vunpack.c.0.s8 %v1505
        %v1507 = vperm.slane %v1503, %v1506
        %v1508 = vrot.slane %v1470, 4
        %v1509 = vsel %vm355, %v1508, %v1468
        %v1511 = vunpack.c.l.s4 1983009808
        %v1512 = vunpack.c.0.s8 %v1511
        %v1513 = vperm.slane %v1509, %v1512
        %v1514 = vsel %vm355, %v1473, %v1462
        %v1516 = vunpack.c.l.s4 1983009808
        %v1517 = vunpack.c.0.s8 %v1516
        %v1518 = vperm.slane %v1514, %v1517
        %v1519 = vrot.slane %v1474, 4
        %v1520 = vsel %vm355, %v1519, %v1472
        %v1522 = vunpack.c.l.s4 1983009808
        %v1523 = vunpack.c.0.s8 %v1522
        %v1524 = vperm.slane %v1520, %v1523
        %v1525 = vrot.slane %v1513, 4
        %v1526 = vsel %vm355, %v1525, %v1507
        %v1527 = vrot.slane %v1507, 4
        %v1528 = vsel %vm355, %v1513, %v1527
        %v1530 = vunpack.c.l.s4 1934713408
        %v1531 = vunpack.c.0.s8 %v1530
        %v1532 = vperm.slane %v1526, %v1531
        %v1534 = vunpack.c.l.s4 1934713408
        %v1535 = vunpack.c.0.s8 %v1534
        %v1536 = vperm.slane %v1528, %v1535
        %v1537 = vrot.slane %v1524, 4
        %v1538 = vsel %vm355, %v1537, %v1518
        %v1539 = vrot.slane %v1518, 4
        %v1540 = vsel %vm355, %v1524, %v1539
        %v1542 = vunpack.c.l.s4 1934713408
        %v1543 = vunpack.c.0.s8 %v1542
        %v1544 = vperm.slane %v1538, %v1543
        %v1546 = vunpack.c.l.s4 1934713408
        %v1547 = vunpack.c.0.s8 %v1546
        %v1548 = vperm.slane %v1540, %v1547
        %v1549 = vrot.slane %v1544, 4
        %v1550 = vsel %vm355, %v1549, %v1532
        %v1551 = vrot.slane %v1532, 4
        %v1552 = vsel %vm355, %v1544, %v1551
        %v1553 = vrot.slane %v1548, 4
        %v1554 = vsel %vm355, %v1553, %v1536
        %v1555 = vrot.slane %v1536, 4
        %v1556 = vsel %vm355, %v1548, %v1555
        %v1557 = vsel %vm355, %v1501, %v1494
        %v1559 = vunpack.c.l.s4 1983009808
        %v1560 = vunpack.c.0.s8 %v1559
        %v1561 = vperm.slane %v1557, %v1560
        %v1562 = vrot.slane %v1502, 4
        %v1563 = vsel %vm355, %v1562, %v1500
        %v1565 = vunpack.c.l.s4 1983009808
        %v1566 = vunpack.c.0.s8 %v1565
        %v1567 = vperm.slane %v1563, %v1566
        %v1568 = vrot.slane %v1567, 4
        %v1569 = vsel %vm355, %v1568, %v1561
        %v1570 = vrot.slane %v1561, 4
        %v1571 = vsel %vm355, %v1567, %v1570
        %v1573 = vunpack.c.l.s4 1934713408
        %v1574 = vunpack.c.0.s8 %v1573
        %v1575 = vperm.slane %v1569, %v1574
        %v1577 = vunpack.c.l.s4 1934713408
        %v1578 = vunpack.c.0.s8 %v1577
        %v1579 = vperm.slane %v1571, %v1578
        %v1580 = vrot.slane %v1575, 4
        %v1581 = vsel %vm355, 0.0, %v1580
        %v1582 = vrot.slane %v1579, 4
        %v1583 = vsel %vm355, 0.0, %v1582
        %1584 = vrot.lane.b32.xlu0 %v1274, 96
        %v1585 = vpop.permute.xlu0 %1584
        %1586 = vrot.lane.b32.xlu0 %v1277, 96
        %v1587 = vpop.permute.xlu0 %1586
        %1588 = vrot.lane.b32.xlu0 %v1402, 96
        %v1589 = vpop.permute.xlu0 %1588
        %1590 = vrot.lane.b32.xlu0 %v1404, 96
        %v1591 = vpop.permute.xlu0 %1590
        %1592 = vrot.lane.b32.xlu0 %v1408, 96
        %v1593 = vpop.permute.xlu0 %1592
        %1594 = vrot.lane.b32.xlu0 %v1410, 96
        %v1595 = vpop.permute.xlu0 %1594
        %1596 = vrot.lane.b32.xlu0 %v1414, 96
        %v1597 = vpop.permute.xlu0 %1596
        %1598 = vrot.lane.b32.xlu0 %v1416, 96
        %v1599 = vpop.permute.xlu0 %1598
        %v1608 = vrot.slane %v1593, 4
        %v1609 = vsel %vm355, %v1608, %v1585
        %v1610 = vrot.slane %v1585, 4
        %v1611 = vsel %vm355, %v1593, %v1610
        %v1613 = vunpack.c.l.s4 1983009808
        %v1614 = vunpack.c.0.s8 %v1613
        %v1615 = vperm.slane %v1609, %v1614
        %v1617 = vunpack.c.l.s4 1983009808
        %v1618 = vunpack.c.0.s8 %v1617
        %v1619 = vperm.slane %v1611, %v1618
        %v1620 = vrot.slane %v1597, 4
        %v1621 = vsel %vm355, %v1620, %v1589
        %v1622 = vrot.slane %v1589, 4
        %v1623 = vsel %vm355, %v1597, %v1622
        %v1625 = vunpack.c.l.s4 1983009808
        %v1626 = vunpack.c.0.s8 %v1625
        %v1627 = vperm.slane %v1621, %v1626
        %v1629 = vunpack.c.l.s4 1983009808
        %v1630 = vunpack.c.0.s8 %v1629
        %v1631 = vperm.slane %v1623, %v1630
        %v1632 = vrot.slane %v1627, 4
        %v1633 = vsel %vm355, %v1632, %v1615
        %v1634 = vrot.slane %v1615, 4
        %v1635 = vsel %vm355, %v1627, %v1634
        %v1637 = vunpack.c.l.s4 1934713408
        %v1638 = vunpack.c.0.s8 %v1637
        %v1639 = vperm.slane %v1633, %v1638
        %v1641 = vunpack.c.l.s4 1934713408
        %v1642 = vunpack.c.0.s8 %v1641
        %v1643 = vperm.slane %v1635, %v1642
        %v1644 = vrot.slane %v1631, 4
        %v1645 = vsel %vm355, %v1644, %v1619
        %v1646 = vrot.slane %v1619, 4
        %v1647 = vsel %vm355, %v1631, %v1646
        %v1649 = vunpack.c.l.s4 1934713408
        %v1650 = vunpack.c.0.s8 %v1649
        %v1651 = vperm.slane %v1645, %v1650
        %v1653 = vunpack.c.l.s4 1934713408
        %v1654 = vunpack.c.0.s8 %v1653
        %v1655 = vperm.slane %v1647, %v1654
        %v1656 = vrot.slane %v1639, 4
        %v1657 = vsel %vm355, 0.0, %v1656
        %v1658 = vrot.slane %v1643, 4
        %v1659 = vsel %vm355, 0.0, %v1658
        %v1660 = vrot.slane %v1651, 4
        %v1661 = vsel %vm355, 0.0, %v1660
        %v1662 = vrot.slane %v1655, 4
        %v1663 = vsel %vm355, 0.0, %v1662
        %v1664 = vrot.slane %v1595, 4
        %v1665 = vsel %vm355, %v1664, %v1587
        %v1667 = vunpack.c.l.s4 1983009808
        %v1668 = vunpack.c.0.s8 %v1667
        %v1669 = vperm.slane %v1665, %v1668
        %v1670 = vrot.slane %v1599, 4
        %v1671 = vsel %vm355, %v1670, %v1591
        %v1673 = vunpack.c.l.s4 1983009808
        %v1674 = vunpack.c.0.s8 %v1673
        %v1675 = vperm.slane %v1671, %v1674
        %v1676 = vrot.slane %v1675, 4
        %v1677 = vsel %vm355, %v1676, %v1669
        %v1678 = vrot.slane %v1669, 4
        %v1679 = vsel %vm355, %v1675, %v1678
        %v1681 = vunpack.c.l.s4 1934713408
        %v1682 = vunpack.c.0.s8 %v1681
        %v1683 = vperm.slane %v1677, %v1682
        %v1685 = vunpack.c.l.s4 1934713408
        %v1686 = vunpack.c.0.s8 %v1685
        %v1687 = vperm.slane %v1679, %v1686
        %v1688 = vrot.slane %v1683, 4
        %v1689 = vsel %vm355, 0.0, %v1688
        %v1690 = vrot.slane %v1687, 4
        %v1691 = vsel %vm355, 0.0, %v1690
        %v1692 = vsel %vm355, %v1658, %v1639
        %v1694 = vunpack.c.l.s4 1983009808
        %v1695 = vunpack.c.0.s8 %v1694
        %v1696 = vperm.slane %v1692, %v1695
        %v1697 = vrot.slane %v1659, 4
        %v1698 = vsel %vm355, %v1697, %v1657
        %v1700 = vunpack.c.l.s4 1983009808
        %v1701 = vunpack.c.0.s8 %v1700
        %v1702 = vperm.slane %v1698, %v1701
        %v1703 = vsel %vm355, %v1662, %v1651
        %v1705 = vunpack.c.l.s4 1983009808
        %v1706 = vunpack.c.0.s8 %v1705
        %v1707 = vperm.slane %v1703, %v1706
        %v1708 = vrot.slane %v1663, 4
        %v1709 = vsel %vm355, %v1708, %v1661
        %v1711 = vunpack.c.l.s4 1983009808
        %v1712 = vunpack.c.0.s8 %v1711
        %v1713 = vperm.slane %v1709, %v1712
        %v1714 = vrot.slane %v1702, 4
        %v1715 = vsel %vm355, %v1714, %v1696
        %v1716 = vrot.slane %v1696, 4
        %v1717 = vsel %vm355, %v1702, %v1716
        %v1719 = vunpack.c.l.s4 1934713408
        %v1720 = vunpack.c.0.s8 %v1719
        %v1721 = vperm.slane %v1715, %v1720
        %v1723 = vunpack.c.l.s4 1934713408
        %v1724 = vunpack.c.0.s8 %v1723
        %v1725 = vperm.slane %v1717, %v1724
        %v1726 = vrot.slane %v1713, 4
        %v1727 = vsel %vm355, %v1726, %v1707
        %v1728 = vrot.slane %v1707, 4
        %v1729 = vsel %vm355, %v1713, %v1728
        %v1731 = vunpack.c.l.s4 1934713408
        %v1732 = vunpack.c.0.s8 %v1731
        %v1733 = vperm.slane %v1727, %v1732
        %v1735 = vunpack.c.l.s4 1934713408
        %v1736 = vunpack.c.0.s8 %v1735
        %v1737 = vperm.slane %v1729, %v1736
        %v1738 = vrot.slane %v1733, 4
        %v1739 = vsel %vm355, %v1738, %v1721
        %v1740 = vrot.slane %v1721, 4
        %v1741 = vsel %vm355, %v1733, %v1740
        %v1742 = vrot.slane %v1737, 4
        %v1743 = vsel %vm355, %v1742, %v1725
        %v1744 = vrot.slane %v1725, 4
        %v1745 = vsel %vm355, %v1737, %v1744
        %v1746 = vsel %vm355, %v1690, %v1683
        %v1748 = vunpack.c.l.s4 1983009808
        %v1749 = vunpack.c.0.s8 %v1748
        %v1750 = vperm.slane %v1746, %v1749
        %v1751 = vrot.slane %v1691, 4
        %v1752 = vsel %vm355, %v1751, %v1689
        %v1754 = vunpack.c.l.s4 1983009808
        %v1755 = vunpack.c.0.s8 %v1754
        %v1756 = vperm.slane %v1752, %v1755
        %v1757 = vrot.slane %v1756, 4
        %v1758 = vsel %vm355, %v1757, %v1750
        %v1759 = vrot.slane %v1750, 4
        %v1760 = vsel %vm355, %v1756, %v1759
        %v1762 = vunpack.c.l.s4 1934713408
        %v1763 = vunpack.c.0.s8 %v1762
        %v1764 = vperm.slane %v1758, %v1763
        %v1766 = vunpack.c.l.s4 1934713408
        %v1767 = vunpack.c.0.s8 %v1766
        %v1768 = vperm.slane %v1760, %v1767
        %v1769 = vrot.slane %v1764, 4
        %v1770 = vsel %vm355, 0.0, %v1769
        %v1771 = vrot.slane %v1768, 4
        %v1772 = vsel %vm355, 0.0, %v1771
        %v1774 = vperm.slane %v318, 0
        %v1777 = vsel %vm709, %v1392, 0
        %v1780 = vsel %vm709, %v1550, 0
        %v1783 = vsel %vm709, %v1575, 0
        %1785 = vmatpush.xpose.msra.mxu0 0.0
        %1786 = vmatpush.xpose.msra.mxu0 0.0
        %1787 = vmatpush.xpose.msra.mxu0 0.0
        %1788 = vmatpush.xpose.msra.mxu0 0.0
        %1789 = vmatpush.xpose.msra.mxu0 0.0
        %1790 = vmatpush.xpose.msra.mxu0 0.0
        %1791 = vmatpush.xpose.msra.mxu0 0.0
        %1792 = vmatpush.xpose.msra.mxu0 0.0
        %1793 = vmatpush.xpose.msra.mxu0 0.0
        %1794 = vmatpush.xpose.msra.mxu0 0.0
        %1795 = vmatpush.xpose.msra.mxu0 0.0
        %1796 = vmatpush.xpose.msra.mxu0 0.0
        %1797 = vmatpush.xpose.msra.mxu0 0.0
        %1798 = vmatpush.xpose.msra.mxu0 0.0
        %1799 = vmatpush.xpose.msra.mxu0 %v1783
        %1800 = vmatpush.xpose.msra.mxu0 %v1780
        %1801 = vmatmul.f32.gmra.mxu0 %v1777
        %v1802 = vpop.f32.mrf.mxu0
        %v1803 = vadd.f32 %v1774, %v1802
        %1804 = vdwg.mxu0
        %v1806 = vsel %vm709, %v1394, 0
        %v1809 = vsel %vm709, %v1552, 0
        %v1812 = vsel %vm709, %v1581, 0
        %1814 = vmatpush.xpose.msra.mxu0 0.0
        %1815 = vmatpush.xpose.msra.mxu0 0.0
        %1816 = vmatpush.xpose.msra.mxu0 0.0
        %1817 = vmatpush.xpose.msra.mxu0 0.0
        %1818 = vmatpush.xpose.msra.mxu0 0.0
        %1819 = vmatpush.xpose.msra.mxu0 0.0
        %1820 = vmatpush.xpose.msra.mxu0 0.0
        %1821 = vmatpush.xpose.msra.mxu0 0.0
        %1822 = vmatpush.xpose.msra.mxu0 0.0
        %1823 = vmatpush.xpose.msra.mxu0 0.0
        %1824 = vmatpush.xpose.msra.mxu0 0.0
        %1825 = vmatpush.xpose.msra.mxu0 0.0
        %1826 = vmatpush.xpose.msra.mxu0 0.0
        %1827 = vmatpush.xpose.msra.mxu0 0.0
        %1828 = vmatpush.xpose.msra.mxu0 %v1812
        %1829 = vmatpush.xpose.msra.mxu0 %v1809
        %1830 = vmatmul.f32.gmra.mxu0 %v1806
        %v1831 = vpop.f32.mrf.mxu0
        %v1832 = vadd.f32 %v1774, %v1831
        %1833 = vdwg.mxu0
        %v1835 = vsel %vm709, %v1396, 0
        %v1838 = vsel %vm709, %v1554, 0
        %v1841 = vsel %vm709, %v1579, 0
        %1843 = vmatpush.xpose.msra.mxu0 0.0
        %1844 = vmatpush.xpose.msra.mxu0 0.0
        %1845 = vmatpush.xpose.msra.mxu0 0.0
        %1846 = vmatpush.xpose.msra.mxu0 0.0
        %1847 = vmatpush.xpose.msra.mxu0 0.0
        %1848 = vmatpush.xpose.msra.mxu0 0.0
        %1849 = vmatpush.xpose.msra.mxu0 0.0
        %1850 = vmatpush.xpose.msra.mxu0 0.0
        %1851 = vmatpush.xpose.msra.mxu0 0.0
        %1852 = vmatpush.xpose.msra.mxu0 0.0
        %1853 = vmatpush.xpose.msra.mxu0 0.0
        %1854 = vmatpush.xpose.msra.mxu0 0.0
        %1855 = vmatpush.xpose.msra.mxu0 0.0
        %1856 = vmatpush.xpose.msra.mxu0 0.0
        %1857 = vmatpush.xpose.msra.mxu0 %v1841
        %1858 = vmatpush.xpose.msra.mxu0 %v1838
        %1859 = vmatmul.f32.gmra.mxu0 %v1835
        %v1860 = vpop.f32.mrf.mxu0
        %v1861 = vadd.f32 %v1774, %v1860
        %1862 = vdwg.mxu0
        %v1864 = vsel %vm709, %v1398, 0
        %v1867 = vsel %vm709, %v1556, 0
        %v1870 = vsel %vm709, %v1583, 0
        %1872 = vmatpush.xpose.msra.mxu0 0.0
        %1873 = vmatpush.xpose.msra.mxu0 0.0
        %1874 = vmatpush.xpose.msra.mxu0 0.0
        %1875 = vmatpush.xpose.msra.mxu0 0.0
        %1876 = vmatpush.xpose.msra.mxu0 0.0
        %1877 = vmatpush.xpose.msra.mxu0 0.0
        %1878 = vmatpush.xpose.msra.mxu0 0.0
        %1879 = vmatpush.xpose.msra.mxu0 0.0
        %1880 = vmatpush.xpose.msra.mxu0 0.0
        %1881 = vmatpush.xpose.msra.mxu0 0.0
        %1882 = vmatpush.xpose.msra.mxu0 0.0
        %1883 = vmatpush.xpose.msra.mxu0 0.0
        %1884 = vmatpush.xpose.msra.mxu0 0.0
        %1885 = vmatpush.xpose.msra.mxu0 0.0
        %1886 = vmatpush.xpose.msra.mxu0 %v1870
        %1887 = vmatpush.xpose.msra.mxu0 %v1867
        %1888 = vmatmul.f32.gmra.mxu0 %v1864
        %v1889 = vpop.f32.mrf.mxu0
        %v1890 = vadd.f32 %v1774, %v1889
        %1891 = vdwg.mxu0
        %vm1892 = vcmask 97280
        %v1893 = vsel %vm1892, %v1803, -inf
        %1894 = vmax.xlane.f32.xlu0 %v1893
        %v1895 = vpop.xlane.xlu0 %1894
        %v1896 = vsel %vm1892, %v1832, -inf
        %1897 = vmax.xlane.f32.xlu0 %v1896
        %v1898 = vpop.xlane.xlu0 %1897
        %v1899 = vsel %vm1892, %v1861, -inf
        %1900 = vmax.xlane.f32.xlu0 %v1899
        %v1901 = vpop.xlane.xlu0 %1900
        %v1902 = vsel %vm1892, %v1890, -inf
        %1903 = vmax.xlane.f32.xlu0 %v1902
        %v1904 = vpop.xlane.xlu0 %1903
        %v1905 = vsub.f32 %v1803, %v1895
        %v1906 = vsub.f32 %v1832, %v1898
        %v1907 = vsub.f32 %v1861, %v1901
        %v1908 = vsub.f32 %v1890, %v1904
        %v1909 = vmul.f32 %v1905, 1.442695
        %v1910 = vpow.pop %v1909
        %v1911 = vmul.f32 %v1906, 1.442695
        %v1912 = vpow.pop %v1911
        %v1913 = vmul.f32 %v1907, 1.442695
        %v1914 = vpow.pop %v1913
        %v1915 = vmul.f32 %v1908, 1.442695
        %v1916 = vpow.pop %v1915
        %v1917 = vsel %vm1892, %v1910, 0.0
        %1918 = vadd.xlane.f32.xlu0 %v1917
        %v1919 = vpop.xlane.xlu0 %1918
        %v1920 = vsel %vm1892, %v1912, 0.0
        %1921 = vadd.xlane.f32.xlu0 %v1920
        %v1922 = vpop.xlane.xlu0 %1921
        %v1923 = vsel %vm1892, %v1914, 0.0
        %1924 = vadd.xlane.f32.xlu0 %v1923
        %v1925 = vpop.xlane.xlu0 %1924
        %v1926 = vsel %vm1892, %v1916, 0.0
        %1927 = vadd.xlane.f32.xlu0 %v1926
        %v1928 = vpop.xlane.xlu0 %1927
        %v1929 = vrcp.pop %v1919
        %v1930 = vmul.f32 %v1919, %v1929
        %v1931 = vsub.f32 1.0, %v1930
        %v1932 = vmul.f32 %v1929, %v1931
        %v1933 = vadd.f32 %v1929, %v1932
        %vm1934 = vweird.f32 %v1919
        %vm1935 = vweird.f32 %v1929
        %vm1936 = vmor %vm1934, %vm1935
        %v1937 = vsel %vm1936, %v1929, %v1933
        %v1938 = vand.u32 2147483647, %v1919
        %vm1939 = vcmp.eq.f32.partialorder %v1938, 8.507059e+37
        %v1940 = vand.u32 %v1919, 2147483648
        %v1941 = vor.u32 1.1754944e-38, %v1940
        %v1942 = vsel %vm1939, %v1941, %v1937
        %v1943 = vmul.f32 %v1910, %v1942
        %v1944 = vrcp.pop %v1922
        %v1945 = vmul.f32 %v1922, %v1944
        %v1946 = vsub.f32 1.0, %v1945
        %v1947 = vmul.f32 %v1944, %v1946
        %v1948 = vadd.f32 %v1944, %v1947
        %vm1949 = vweird.f32 %v1922
        %vm1950 = vweird.f32 %v1944
        %vm1951 = vmor %vm1949, %vm1950
        %v1952 = vsel %vm1951, %v1944, %v1948
        %v1953 = vand.u32 2147483647, %v1922
        %vm1954 = vcmp.eq.f32.partialorder %v1953, 8.507059e+37
        %v1955 = vand.u32 %v1922, 2147483648
        %v1956 = vor.u32 1.1754944e-38, %v1955
        %v1957 = vsel %vm1954, %v1956, %v1952
        %v1958 = vmul.f32 %v1912, %v1957
        %v1959 = vrcp.pop %v1925
        %v1960 = vmul.f32 %v1925, %v1959
        %v1961 = vsub.f32 1.0, %v1960
        %v1962 = vmul.f32 %v1959, %v1961
        %v1963 = vadd.f32 %v1959, %v1962
        %vm1964 = vweird.f32 %v1925
        %vm1965 = vweird.f32 %v1959
        %vm1966 = vmor %vm1964, %vm1965
        %v1967 = vsel %vm1966, %v1959, %v1963
        %v1968 = vand.u32 2147483647, %v1925
        %vm1969 = vcmp.eq.f32.partialorder %v1968, 8.507059e+37
        %v1970 = vand.u32 %v1925, 2147483648
        %v1971 = vor.u32 1.1754944e-38, %v1970
        %v1972 = vsel %vm1969, %v1971, %v1967
        %v1973 = vmul.f32 %v1914, %v1972
        %v1974 = vrcp.pop %v1928
        %v1975 = vmul.f32 %v1928, %v1974
        %v1976 = vsub.f32 1.0, %v1975
        %v1977 = vmul.f32 %v1974, %v1976
        %v1978 = vadd.f32 %v1974, %v1977
        %vm1979 = vweird.f32 %v1928
        %vm1980 = vweird.f32 %v1974
        %vm1981 = vmor %vm1979, %vm1980
        %v1982 = vsel %vm1981, %v1974, %v1978
        %v1983 = vand.u32 2147483647, %v1928
        %vm1984 = vcmp.eq.f32.partialorder %v1983, 8.507059e+37
        %v1985 = vand.u32 %v1928, 2147483648
        %v1986 = vor.u32 1.1754944e-38, %v1985
        %v1987 = vsel %vm1984, %v1986, %v1982
        %v1988 = vmul.f32 %v1916, %v1987
        %v1990 = vsel %vm1892, %v1943, 0
        %vm1992 = vcmask 1043456
        %v1994 = vsel %vm1992, %v1764, 0
        %1996 = vmatpush.msra.mxu0 0.0
        %1997 = vmatpush.msra.mxu0 0.0
        %1998 = vmatpush.msra.mxu0 0.0
        %1999 = vmatpush.msra.mxu0 0.0
        %2000 = vmatpush.msra.mxu0 0.0
        %2001 = vmatpush.msra.mxu0 0.0
        %2002 = vmatpush.msra.mxu0 0.0
        %2003 = vmatpush.msra.mxu0 0.0
        %2004 = vmatpush.msra.mxu0 0.0
        %2005 = vmatpush.msra.mxu0 0.0
        %2006 = vmatpush.msra.mxu0 0.0
        %2007 = vmatpush.msra.mxu0 0.0
        %2008 = vmatpush.msra.mxu0 0.0
        %2009 = vmatpush.msra.mxu0 0.0
        %2010 = vmatpush.msra.mxu0 %v1994
        %2011 = vmatpush.msra.mxu0 %v1739
        %2012 = vmatmul.f32.gmra.mxu0 %v1990
        %v2013 = vpop.f32.mrf.mxu0
        %v2014 = vadd.f32 0.0, %v2013
        %2015 = vdwg.mxu0
        %v2017 = vsel %vm1892, %v1958, 0
        %v2020 = vsel %vm1992, %v1770, 0
        %2022 = vmatpush.msra.mxu0 0.0
        %2023 = vmatpush.msra.mxu0 0.0
        %2024 = vmatpush.msra.mxu0 0.0
        %2025 = vmatpush.msra.mxu0 0.0
        %2026 = vmatpush.msra.mxu0 0.0
        %2027 = vmatpush.msra.mxu0 0.0
        %2028 = vmatpush.msra.mxu0 0.0
        %2029 = vmatpush.msra.mxu0 0.0
        %2030 = vmatpush.msra.mxu0 0.0
        %2031 = vmatpush.msra.mxu0 0.0
        %2032 = vmatpush.msra.mxu0 0.0
        %2033 = vmatpush.msra.mxu0 0.0
        %2034 = vmatpush.msra.mxu0 0.0
        %2035 = vmatpush.msra.mxu0 0.0
        %2036 = vmatpush.msra.mxu0 %v2020
        %2037 = vmatpush.msra.mxu0 %v1741
        %2038 = vmatmul.f32.gmra.mxu0 %v2017
        %v2039 = vpop.f32.mrf.mxu0
        %v2040 = vadd.f32 0.0, %v2039
        %2041 = vdwg.mxu0
        %v2043 = vsel %vm1892, %v1973, 0
        %v2046 = vsel %vm1992, %v1768, 0
        %2048 = vmatpush.msra.mxu0 0.0
        %2049 = vmatpush.msra.mxu0 0.0
        %2050 = vmatpush.msra.mxu0 0.0
        %2051 = vmatpush.msra.mxu0 0.0
        %2052 = vmatpush.msra.mxu0 0.0
        %2053 = vmatpush.msra.mxu0 0.0
        %2054 = vmatpush.msra.mxu0 0.0
        %2055 = vmatpush.msra.mxu0 0.0
        %2056 = vmatpush.msra.mxu0 0.0
        %2057 = vmatpush.msra.mxu0 0.0
        %2058 = vmatpush.msra.mxu0 0.0
        %2059 = vmatpush.msra.mxu0 0.0
        %2060 = vmatpush.msra.mxu0 0.0
        %2061 = vmatpush.msra.mxu0 0.0
        %2062 = vmatpush.msra.mxu0 %v2046
        %2063 = vmatpush.msra.mxu0 %v1743
        %2064 = vmatmul.f32.gmra.mxu0 %v2043
        %v2065 = vpop.f32.mrf.mxu0
        %v2066 = vadd.f32 0.0, %v2065
        %2067 = vdwg.mxu0
        %v2069 = vsel %vm1892, %v1988, 0
        %v2072 = vsel %vm1992, %v1772, 0
        %2074 = vmatpush.msra.mxu0 0.0
        %2075 = vmatpush.msra.mxu0 0.0
        %2076 = vmatpush.msra.mxu0 0.0
        %2077 = vmatpush.msra.mxu0 0.0
        %2078 = vmatpush.msra.mxu0 0.0
        %2079 = vmatpush.msra.mxu0 0.0
        %2080 = vmatpush.msra.mxu0 0.0
        %2081 = vmatpush.msra.mxu0 0.0
        %2082 = vmatpush.msra.mxu0 0.0
        %2083 = vmatpush.msra.mxu0 0.0
        %2084 = vmatpush.msra.mxu0 0.0
        %2085 = vmatpush.msra.mxu0 0.0
        %2086 = vmatpush.msra.mxu0 0.0
        %2087 = vmatpush.msra.mxu0 0.0
        %2088 = vmatpush.msra.mxu0 %v2072
        %2089 = vmatpush.msra.mxu0 %v1745
        %2090 = vmatmul.f32.gmra.mxu0 %v2069
        %v2091 = vpop.f32.mrf.mxu0
        %v2092 = vadd.f32 0.0, %v2091
        %2093 = vdwg.mxu0
        %v2094 = vrot.slane %v2066, 4
        %v2095 = vsel %vm355, %v2094, %v2014
        %v2096 = vrot.slane %v2014, 4
        %v2097 = vsel %vm355, %v2066, %v2096
        %v2099 = vunpack.c.l.s4 1983009808
        %v2100 = vunpack.c.0.s8 %v2099
        %v2101 = vperm.slane %v2095, %v2100
        %v2103 = vunpack.c.l.s4 1983009808
        %v2104 = vunpack.c.0.s8 %v2103
        %v2105 = vperm.slane %v2097, %v2104
        %v2106 = vrot.slane %v2092, 4
        %v2107 = vsel %vm355, %v2106, %v2040
        %v2108 = vrot.slane %v2040, 4
        %v2109 = vsel %vm355, %v2092, %v2108
        %v2111 = vunpack.c.l.s4 1983009808
        %v2112 = vunpack.c.0.s8 %v2111
        %v2113 = vperm.slane %v2107, %v2112
        %v2115 = vunpack.c.l.s4 1983009808
        %v2116 = vunpack.c.0.s8 %v2115
        %v2117 = vperm.slane %v2109, %v2116
        %v2118 = vrot.slane %v2113, 4
        %v2119 = vsel %vm355, %v2118, %v2101
        %v2120 = vrot.slane %v2101, 4
        %v2121 = vsel %vm355, %v2113, %v2120
        %v2123 = vunpack.c.l.s4 1934713408
        %v2124 = vunpack.c.0.s8 %v2123
        %v2125 = vperm.slane %v2119, %v2124
        %v2127 = vunpack.c.l.s4 1934713408
        %v2128 = vunpack.c.0.s8 %v2127
        %v2129 = vperm.slane %v2121, %v2128
        %v2130 = vrot.slane %v2117, 4
        %v2131 = vsel %vm355, %v2130, %v2105
        %v2132 = vrot.slane %v2105, 4
        %v2133 = vsel %vm355, %v2117, %v2132
        %v2135 = vunpack.c.l.s4 1934713408
        %v2136 = vunpack.c.0.s8 %v2135
        %v2137 = vperm.slane %v2131, %v2136
        %v2139 = vunpack.c.l.s4 1934713408
        %v2140 = vunpack.c.0.s8 %v2139
        %v2141 = vperm.slane %v2133, %v2140
        %v2142 = vrot.slane %v2125, 4
        %v2143 = vsel %vm355, 0.0, %v2142
        %v2144 = vrot.slane %v2129, 4
        %v2145 = vsel %vm355, 0.0, %v2144
        %v2146 = vrot.slane %v2137, 4
        %v2147 = vsel %vm355, 0.0, %v2146
        %v2148 = vrot.slane %v2141, 4
        %v2149 = vsel %vm355, 0.0, %v2148
        %v2150 = vsel %vm355, %v2144, %v2125
        %v2152 = vunpack.c.l.s4 1983009808
        %v2153 = vunpack.c.0.s8 %v2152
        %v2154 = vperm.slane %v2150, %v2153
        %v2155 = vrot.slane %v2145, 4
        %v2156 = vsel %vm355, %v2155, %v2143
        %v2158 = vunpack.c.l.s4 1983009808
        %v2159 = vunpack.c.0.s8 %v2158
        %v2160 = vperm.slane %v2156, %v2159
        %v2161 = vsel %vm355, %v2148, %v2137
        %v2163 = vunpack.c.l.s4 1983009808
        %v2164 = vunpack.c.0.s8 %v2163
        %v2165 = vperm.slane %v2161, %v2164
        %v2166 = vrot.slane %v2149, 4
        %v2167 = vsel %vm355, %v2166, %v2147
        %v2169 = vunpack.c.l.s4 1983009808
        %v2170 = vunpack.c.0.s8 %v2169
        %v2171 = vperm.slane %v2167, %v2170
        %v2172 = vrot.slane %v2160, 4
        %v2173 = vsel %vm355, %v2172, %v2154
        %v2174 = vrot.slane %v2154, 4
        %v2175 = vsel %vm355, %v2160, %v2174
        %v2177 = vunpack.c.l.s4 1934713408
        %v2178 = vunpack.c.0.s8 %v2177
        %v2179 = vperm.slane %v2173, %v2178
        %v2181 = vunpack.c.l.s4 1934713408
        %v2182 = vunpack.c.0.s8 %v2181
        %v2183 = vperm.slane %v2175, %v2182
        %v2184 = vrot.slane %v2171, 4
        %v2185 = vsel %vm355, %v2184, %v2165
        %v2186 = vrot.slane %v2165, 4
        %v2187 = vsel %vm355, %v2171, %v2186
        %v2189 = vunpack.c.l.s4 1934713408
        %v2190 = vunpack.c.0.s8 %v2189
        %v2191 = vperm.slane %v2185, %v2190
        %v2193 = vunpack.c.l.s4 1934713408
        %v2194 = vunpack.c.0.s8 %v2193
        %v2195 = vperm.slane %v2187, %v2194
        %v2196 = vrot.slane %v2191, 4
        %v2197 = vsel %vm355, %v2196, %v2179
        %v2198 = vrot.slane %v2179, 4
        %v2199 = vsel %vm355, %v2191, %v2198
        %v2200 = vrot.slane %v2195, 4
        %v2201 = vsel %vm355, %v2200, %v2183
        %v2202 = vrot.slane %v2183, 4
        %v2203 = vsel %vm355, %v2195, %v2202
        %2205 = vrot.lane.b32.xlu0 %v2199, 8
        %v2206 = vpop.permute.xlu0 %2205
        %2209 = vrot.lane.b32.xlu0 %v2201, 16
        %v2210 = vpop.permute.xlu0 %2209
        %2213 = vrot.lane.b32.xlu0 %v2203, 24
        %v2214 = vpop.permute.xlu0 %2213
        %v2216 = vsel %vm709, %v2197, %v2206
        %v2217 = vsel %vm1125, %v2216, %v2210
        %v2218 = vsel %vm1127, %v2217, %v2214
        %2219 = vrot.lane.b32.xlu0 %v295, 32
        %v2220 = vpop.permute.xlu0 %2219
        %2221 = vrot.lane.b32.xlu0 %v296, 32
        %v2222 = vpop.permute.xlu0 %2221
        %2223 = vrot.lane.b32.xlu0 %v297, 32
        %v2224 = vpop.permute.xlu0 %2223
        %2225 = vrot.lane.b32.xlu0 %v298, 32
        %v2226 = vpop.permute.xlu0 %2225
        %2231 = vrot.lane.b32.xlu0 %v1206, 32
        %v2232 = vpop.permute.xlu0 %2231
        %v2235 = vsel %vm320, %v2218, 0
        %2237 = vmatpush.msra.mxu0 0.0
        %2238 = vmatpush.msra.mxu0 0.0
        %2239 = vmatpush.msra.mxu0 0.0
        %2240 = vmatpush.msra.mxu0 0.0
        %2241 = vmatpush.msra.mxu0 0.0
        %2242 = vmatpush.msra.mxu0 0.0
        %2243 = vmatpush.msra.mxu0 0.0
        %2244 = vmatpush.msra.mxu0 0.0
        %2245 = vmatpush.msra.mxu0 0.0
        %2246 = vmatpush.msra.mxu0 0.0
        %2247 = vmatpush.msra.mxu0 0.0
        %2248 = vmatpush.msra.mxu0 0.0
        %2249 = vmatpush.msra.mxu0 %v2226
        %2250 = vmatpush.msra.mxu0 %v2224
        %2251 = vmatpush.msra.mxu0 %v2222
        %2252 = vmatpush.msra.mxu0 %v2220
        %2253 = vmatmul.f32.gmra.mxu0 %v2235
        %v2254 = vpop.f32.mrf.mxu0
        %v2255 = vadd.f32 %v2232, %v2254
        %2256 = vdwg.mxu0
        %v2257 = vadd.f32 %v1205, %v2255
        %v2258 = vsel %vm320, %v2257, 0.0
        %2259 = vadd.xlane.f32.xlu0 %v2258
        %v2260 = vpop.xlane.xlu0 %2259
        %v2261 = vmul.f32 %v2260, %v1182
        %v2262 = vsub.f32 %v2257, %v2261
        %v2263 = vmul.f32 %v2262, %v2262
        %v2264 = vsel %vm320, %v2263, 0.0
        %2265 = vadd.xlane.f32.xlu0 %v2264
        %v2266 = vpop.xlane.xlu0 %2265
        %v2267 = vmul.f32 %v2266, %v1182
        %v2268 = vadd.f32 %v2267, 1e-05
        %v2269 = vrsqrt.pop %v2268
        %v2270 = vmul.f32 %v2269, %v2268
        %v2271 = vmul.f32 %v2270, %v2269
        %v2272 = vmul.f32 0.5, %v2271
        %v2273 = vsub.f32 1.5, %v2272
        %v2274 = vmul.f32 %v2269, %v2273
        %vm2275 = vweird.f32 %v2268
        %vm2276 = vweird.f32 %v2269
        %vm2277 = vmor %vm2275, %vm2276
        %v2278 = vsel %vm2277, %v2269, %v2274
        %v2279 = vmul.f32 %v2262, %v2278
        %v2280 = vperm.slane %v311, 6
        %v2281 = vmul.f32 %v2279, %v2280
        %v2282 = vperm.slane %v311, 7
        %v2283 = vadd.f32 %v2281, %v2282
        %v2284 = vperm.slane %v311, 2
        %v2286 = vsel %vm320, %v2283, 0
        %2288 = vmatpush.msra.mxu0 0.0
        %2289 = vmatpush.msra.mxu0 0.0
        %2290 = vmatpush.msra.mxu0 0.0
        %2291 = vmatpush.msra.mxu0 0.0
        %2292 = vmatpush.msra.mxu0 0.0
        %2293 = vmatpush.msra.mxu0 0.0
        %2294 = vmatpush.msra.mxu0 0.0
        %2295 = vmatpush.msra.mxu0 0.0
        %2296 = vmatpush.msra.mxu0 0.0
        %2297 = vmatpush.msra.mxu0 0.0
        %2298 = vmatpush.msra.mxu0 0.0
        %2299 = vmatpush.msra.mxu0 0.0
        %2300 = vmatpush.msra.mxu0 %v302
        %2301 = vmatpush.msra.mxu0 %v301
        %2302 = vmatpush.msra.mxu0 %v300
        %2303 = vmatpush.msra.mxu0 %v299
        %2304 = vmatmul.f32.gmra.mxu0 %v2286
        %v2305 = vpop.f32.mrf.mxu0
        %v2306 = vadd.f32 %v2284, %v2305
        %2307 = vdwg.mxu0
        %v2308 = vmax.f32 %v2306, 0.0
        %v2309 = vperm.slane %v311, 3
        %vm2310 = vcmask 523264
        %v2312 = vsel %vm2310, %v2308, 0
        %2314 = vmatpush.msra.mxu0 0.0
        %2315 = vmatpush.msra.mxu0 0.0
        %2316 = vmatpush.msra.mxu0 0.0
        %2317 = vmatpush.msra.mxu0 0.0
        %2318 = vmatpush.msra.mxu0 0.0
        %2319 = vmatpush.msra.mxu0 0.0
        %2320 = vmatpush.msra.mxu0 0.0
        %2321 = vmatpush.msra.mxu0 0.0
        %2322 = vmatpush.msra.mxu0 %v310
        %2323 = vmatpush.msra.mxu0 %v309
        %2324 = vmatpush.msra.mxu0 %v308
        %2325 = vmatpush.msra.mxu0 %v307
        %2326 = vmatpush.msra.mxu0 %v306
        %2327 = vmatpush.msra.mxu0 %v305
        %2328 = vmatpush.msra.mxu0 %v304
        %2329 = vmatpush.msra.mxu0 %v303
        %2330 = vmatmul.f32.gmra.mxu0 %v2312
        %v2331 = vpop.f32.mrf.mxu0
        %v2332 = vadd.f32 %v2309, %v2331
        %2333 = vdwg.mxu0
        %v2334 = vadd.f32 %v2283, %v2332
        %v2335 = vsel %vm320, %v2334, 0.0
        %2336 = vadd.xlane.f32.xlu0 %v2335
        %v2337 = vpop.xlane.xlu0 %2336
        %v2338 = vmul.f32 %v2337, %v1182
        %v2339 = vsub.f32 %v2334, %v2338
        %v2340 = vmul.f32 %v2339, %v2339
        %v2341 = vsel %vm320, %v2340, 0.0
        %2342 = vadd.xlane.f32.xlu0 %v2341
        %v2343 = vpop.xlane.xlu0 %2342
        %v2344 = vmul.f32 %v2343, %v1182
        %v2345 = vadd.f32 %v2344, 1e-05
        %v2346 = vrsqrt.pop %v2345
        %v2347 = vmul.f32 %v2346, %v2345
        %v2348 = vmul.f32 %v2347, %v2346
        %v2349 = vmul.f32 0.5, %v2348
        %v2350 = vsub.f32 1.5, %v2349
        %v2351 = vmul.f32 %v2346, %v2350
        %vm2352 = vweird.f32 %v2345
        %vm2353 = vweird.f32 %v2346
        %vm2354 = vmor %vm2352, %vm2353
        %v2355 = vsel %vm2354, %v2346, %v2351
        %v2356 = vmul.f32 %v2339, %v2355
        %v2357 = vperm.slane %v312, 0
        %v2358 = vmul.f32 %v2356, %v2357
        %v2359 = vperm.slane %v312, 1
        %v2360 = vadd.f32 %v2358, %v2359
        %v2361 = vrot.slane %v1973, 4
        %v2362 = vsel %vm355, %v2361, %v1943
        %v2363 = vrot.slane %v1943, 4
        %v2364 = vsel %vm355, %v1973, %v2363
        %v2366 = vunpack.c.l.s4 1983009808
        %v2367 = vunpack.c.0.s8 %v2366
        %v2368 = vperm.slane %v2362, %v2367
        %v2370 = vunpack.c.l.s4 1983009808
        %v2371 = vunpack.c.0.s8 %v2370
        %v2372 = vperm.slane %v2364, %v2371
        %v2373 = vrot.slane %v1988, 4
        %v2374 = vsel %vm355, %v2373, %v1958
        %v2375 = vrot.slane %v1958, 4
        %v2376 = vsel %vm355, %v1988, %v2375
        %v2378 = vunpack.c.l.s4 1983009808
        %v2379 = vunpack.c.0.s8 %v2378
        %v2380 = vperm.slane %v2374, %v2379
        %v2382 = vunpack.c.l.s4 1983009808
        %v2383 = vunpack.c.0.s8 %v2382
        %v2384 = vperm.slane %v2376, %v2383
        %v2385 = vrot.slane %v2380, 4
        %v2386 = vsel %vm355, %v2385, %v2368
        %v2387 = vrot.slane %v2368, 4
        %v2388 = vsel %vm355, %v2380, %v2387
        %v2390 = vunpack.c.l.s4 1934713408
        %v2391 = vunpack.c.0.s8 %v2390
        %v2392 = vperm.slane %v2386, %v2391
        %v2394 = vunpack.c.l.s4 1934713408
        %v2395 = vunpack.c.0.s8 %v2394
        %v2396 = vperm.slane %v2388, %v2395
        %v2397 = vrot.slane %v2384, 4
        %v2398 = vsel %vm355, %v2397, %v2372
        %v2399 = vrot.slane %v2372, 4
        %v2400 = vsel %vm355, %v2384, %v2399
        %v2402 = vunpack.c.l.s4 1934713408
        %v2403 = vunpack.c.0.s8 %v2402
        %v2404 = vperm.slane %v2398, %v2403
        %v2406 = vunpack.c.l.s4 1934713408
        %v2407 = vunpack.c.0.s8 %v2406
        %v2408 = vperm.slane %v2400, %v2407
        %v2409 = vrot.slane %v2392, 4
        %v2410 = vsel %vm355, 0.0, %v2409
        %v2411 = vrot.slane %v2396, 4
        %v2412 = vsel %vm355, 0.0, %v2411
        %v2413 = vrot.slane %v2404, 4
        %v2414 = vsel %vm355, 0.0, %v2413
        %v2415 = vrot.slane %v2408, 4
        %v2416 = vsel %vm355, 0.0, %v2415
        %v2417 = vsel %vm355, %v2411, %v2392
        %v2419 = vunpack.c.l.s4 1983009808
        %v2420 = vunpack.c.0.s8 %v2419
        %v2421 = vperm.slane %v2417, %v2420
        %v2422 = vrot.slane %v2412, 4
        %v2423 = vsel %vm355, %v2422, %v2410
        %v2425 = vunpack.c.l.s4 1983009808
        %v2426 = vunpack.c.0.s8 %v2425
        %v2427 = vperm.slane %v2423, %v2426
        %v2428 = vsel %vm355, %v2415, %v2404
        %v2430 = vunpack.c.l.s4 1983009808
        %v2431 = vunpack.c.0.s8 %v2430
        %v2432 = vperm.slane %v2428, %v2431
        %v2433 = vrot.slane %v2416, 4
        %v2434 = vsel %vm355, %v2433, %v2414
        %v2436 = vunpack.c.l.s4 1983009808
        %v2437 = vunpack.c.0.s8 %v2436
        %v2438 = vperm.slane %v2434, %v2437
        %v2439 = vrot.slane %v2427, 4
        %v2440 = vsel %vm355, %v2439, %v2421
        %v2441 = vrot.slane %v2421, 4
        %v2442 = vsel %vm355, %v2427, %v2441
        %v2444 = vunpack.c.l.s4 1934713408
        %v2445 = vunpack.c.0.s8 %v2444
        %v2446 = vperm.slane %v2440, %v2445
        %v2448 = vunpack.c.l.s4 1934713408
        %v2449 = vunpack.c.0.s8 %v2448
        %v2450 = vperm.slane %v2442, %v2449
        %v2451 = vrot.slane %v2438, 4
        %v2452 = vsel %vm355, %v2451, %v2432
        %v2453 = vrot.slane %v2432, 4
        %v2454 = vsel %vm355, %v2438, %v2453
        %v2456 = vunpack.c.l.s4 1934713408
        %v2457 = vunpack.c.0.s8 %v2456
        %v2458 = vperm.slane %v2452, %v2457
        %v2460 = vunpack.c.l.s4 1934713408
        %v2461 = vunpack.c.0.s8 %v2460
        %v2462 = vperm.slane %v2454, %v2461
        %v2463 = vrot.slane %v2458, 4
        %v2464 = vsel %vm355, %v2463, %v2446
        %v2465 = vrot.slane %v2446, 4
        %v2466 = vsel %vm355, %v2458, %v2465
        %v2467 = vrot.slane %v2462, 4
        %v2468 = vsel %vm355, %v2467, %v2450
        %v2469 = vrot.slane %v2450, 4
        %v2470 = vsel %vm355, %v2462, %v2469
        %2472 = vrot.lane.b32.xlu0 %v2466, 12
        %v2473 = vpop.permute.xlu0 %2472
        %2476 = vrot.lane.b32.xlu0 %v2468, 24
        %v2477 = vpop.permute.xlu0 %2476
        %2480 = vrot.lane.b32.xlu0 %v2470, 36
        %v2481 = vpop.permute.xlu0 %2480
        %v2483 = vsel %vm1892, %v2464, %v2473
        %v2484 = vsel %vm1127, %v2483, %v2477
        %vm2485 = vcmask 293888
        %v2486 = vsel %vm2485, %v2484, %v2481
        %2488 = vrot.lane.b32.xlu0 %v2486, 32
        %v2489 = vpop.permute.xlu0 %2488
        %v2491 = vsel %vm320, %v2360, %v2489
        %vm2492 = vcmask 654336
        %v2493 = vsel %vm2492, %v2491, 0.0
        %2494 = vst [vmem:[%s287] sm:$0xff] %v2493
        %p2495 = scmp.lt.s32.totalorder %s17, 1
        %s2496 = scalar_select %p2495, %s17, 1
        %s2497 = smul.addr %s2496, 8
        %s2498 = scalar_lea.vmem %s5, %s2497
        // Predicated region
        $region45: #{decoder_layer.1} parent=39 // pred_check
          %p2499 = pneg %p160
        $region46: #{decoder_layer.1} parent=39 // pred_check_branch
          %2501 = sbr.rel (%p2499) target = $region48
        $region47: #{decoder_layer.1} parent=39 // pred_region
          _
        $region48: #{decoder_layer.1} parent=39 // pred_fallthru
          _
      $region40: #{decoder_layer.1} parent=5 // pred_fallthru
        _
      %p2502 = scmp.le.s32.totalorder 2, %s12
      // Predicated region
      $region49: #{decoder_layer.1} parent=5 // pred_check
        %p2503 = pneg %p2502
      $region50: #{decoder_layer.1} parent=5 // pred_check_branch
        %2505 = sbr.rel (%p2503) target = $region52
      $region51: #{decoder_layer.1} parent=5 // pred_region
        %s2506 = ssub.s32 %s12, 2
        // Predicated region
        $region53: #{decoder_layer.1} parent=51 // pred_check
          %p2507 = pneg %p166
        $region54: #{decoder_layer.1} parent=51 // pred_check_branch
          %2509 = sbr.rel (%p2507) target = $region56
        $region55: #{decoder_layer.1} parent=51 // pred_region
          %p2510 = scmp.lt.s32.totalorder %s18, 1
          %s2511 = scalar_select %p2510, %s18, 1
          %s2512 = smul.addr %s2511, 8
          %s2513 = scalar_lea.vmem %s5, %s2512
        $region56: #{decoder_layer.1} parent=51 // pred_fallthru
          _
      $region52: #{decoder_layer.1} parent=5 // pred_fallthru
        _
    $region6: #{decoder_layer.1} parent=1 // loop_footer
      %s16 = sadd.s32 1, %s12
    $region7: #{decoder_layer.1} parent=1 // loop_footer_branch
      %11 = sbr.rel target = $region3
    $region8: #{decoder_layer.1} parent=1 // loop_exit
      _
    %2514 = vsyncpa [#allocation3], 1
    %s2515 = scalar_lea.sflag [#allocation3], 1
    %2516 = vsyncpa %s2515, 1

</llo_original>
